<compile_context>
chip_gen: v7x
topology: tpu7x:2x2x1
jax: 0.10.0
libtpu: 0.0.40
codegen_flags: <defaults>
</compile_context>

<pallas_src>
import functools
import math

import jax
import jax.numpy as jnp
from jax.experimental import pallas as pl
from jax.experimental.pallas import tpu as pltpu

_LN_EPS = 1e-5


def _layer_norm(x, w, b):
    # x: (M, C) f32 ; w, b: (1, C) f32
    mu = jnp.mean(x, axis=-1, keepdims=True)
    xc = x - mu
    var = jnp.mean(xc * xc, axis=-1, keepdims=True)
    return xc * jax.lax.rsqrt(var + _LN_EPS) * w + b


def _tblock_kernel(x_ref, ln1_w_ref, ln1_b_ref, wqkv_ref, wproj_ref, bproj_ref,
                   ln2_w_ref, ln2_b_ref, wff1_ref, bff1_ref, wff2_ref, bff2_ref,
                   o_ref, *, n_head, seq_len, kv_block, fused_heads, approx_recip):
    H, T = n_head, seq_len
    C = wqkv_ref.shape[0]
    HC = H * C
    bblk = x_ref.shape[0]
    M = bblk * T

    x = x_ref[...].astype(jnp.float32).reshape(M, C)

    # ---- LayerNorm 1 ----
    h1 = _layer_norm(x, ln1_w_ref[...], ln1_b_ref[...])

    # ---- fused QKV projection for ALL heads: one (M,C)@(C,3HC) MXU matmul ----
    qkv = jnp.dot(h1.astype(wqkv_ref.dtype), wqkv_ref[...],
                  preferred_element_type=jnp.float32)                 # (M, 3HC)

    scale = 1.0 / math.sqrt(C)
    # only slices at offsets 0 / HC / 2HC (128-lane-aligned when HC % 128 == 0);
    # scale is applied to q (M*HC elems) instead of the score tile.
    q = qkv[:, :HC] * scale
    k = qkv[:, HC:2 * HC]
    v = qkv[:, 2 * HC:]

    if fused_heads:
        # Batched-over-heads attention: no per-head loop, no lane-misaligned
        # head slices, no head concat.
        q4 = q.reshape(bblk, T, H, C)
        k4 = k.reshape(bblk, T, H, C)
        v4 = v.reshape(bblk, T, H, C)
        # Flash-style online softmax over KV chunks (static Python loop); the
        # full (bblk,H,T,T) score tile is never materialized for long T.  At
        # small T this is a single chunk == exact softmax with global max.
        m_i = jnp.full((bblk, H, T, 1), -jnp.inf, dtype=jnp.float32)
        l_i = jnp.zeros((bblk, H, T, 1), dtype=jnp.float32)
        acc = jnp.zeros((bblk, H, T, C), dtype=jnp.float32)
        for s0 in range(0, T, kv_block):
            s1 = min(s0 + kv_block, T)
            k_c = k4[:, s0:s1]
            v_c = v4[:, s0:s1]
            s = jnp.einsum('bthc,bshc->bhts', q4, k_c,
                           preferred_element_type=jnp.float32)        # (b,H,T,S)
            m_new = jnp.maximum(m_i, jnp.max(s, axis=-1, keepdims=True))
            alpha = jnp.exp(m_i - m_new)
            p = jnp.exp(s - m_new)
            l_i = alpha * l_i + jnp.sum(p, axis=-1, keepdims=True)
            acc = alpha * acc + jnp.einsum('bhts,bshc->bhtc', p, v_c,
                                           preferred_element_type=jnp.float32)
            m_i = m_new
        att = acc * pl.reciprocal(l_i, approx=approx_recip)           # (b,H,T,C)
        # head-concat + output projection folded into one contraction over (h,c)
        w_proj3 = wproj_ref[...].reshape(H, C, C)
        sa = jnp.einsum('bhtc,hcd->btd', att.astype(w_proj3.dtype), w_proj3,
                        preferred_element_type=jnp.float32).reshape(M, C)
    else:
        # Conservative per-head fallback (only used if the batched-head einsums
        # fail to lower on the installed Mosaic version).
        head_outs = []
        for h in range(H):
            qh = q[:, h * C:(h + 1) * C].reshape(bblk, T, C)
            kh = k[:, h * C:(h + 1) * C].reshape(bblk, T, C)
            vh = v[:, h * C:(h + 1) * C].reshape(bblk, T, C)
            s = jnp.einsum('btc,bsc->bts', qh, kh,
                           preferred_element_type=jnp.float32)
            s = s - jnp.max(s, axis=-1, keepdims=True)
            p = jnp.exp(s)
            p = p * pl.reciprocal(jnp.sum(p, axis=-1, keepdims=True),
                                  approx=approx_recip)
            head_outs.append(jnp.einsum('bts,bsc->btc', p, vh,
                                        preferred_element_type=jnp.float32))
        cat = jnp.concatenate(head_outs, axis=-1).reshape(M, HC)
        sa = jnp.dot(cat.astype(wproj_ref.dtype), wproj_ref[...],
                     preferred_element_type=jnp.float32)

    x1 = x + (sa + bproj_ref[...])                                    # residual 1

    # ---- LayerNorm 2 + FeedForward ----
    h2 = _layer_norm(x1, ln2_w_ref[...], ln2_b_ref[...])
    ff = jnp.dot(h2.astype(wff1_ref.dtype), wff1_ref[...],
                 preferred_element_type=jnp.float32) + bff1_ref[...]
    ff = jnp.maximum(ff, 0.0)
    ff = jnp.dot(ff.astype(wff2_ref.dtype), wff2_ref[...],
                 preferred_element_type=jnp.float32) + bff2_ref[...]

    out = x1 + ff                                                     # residual 2
    o_ref[...] = out.reshape(o_ref.shape).astype(o_ref.dtype)


def _vmem_limit_bytes():
    """Per-generation scoped-VMEM limit (v5e/v6e: 128 MiB physical, v7x: 64 MiB)."""
    try:
        cap = int(pltpu.get_tpu_info().vmem_capacity_bytes)
    except Exception:
        cap = 64 * 2**20                     # conservative: assume v7x-sized VMEM
    if cap >= 128 * 2**20:
        return 96 * 2**20                    # v5e / v6e
    return max(32 * 2**20, min(cap - 16 * 2**20, 48 * 2**20))         # v7x-class


def _pick_batch_block(B, T, C, n_head, *, resident_bytes, io_itemsize,
                      vmem_budget, kv_block, target_rows=512):
    """Largest divisor of B whose per-step working set fits the budget.

    Capped at B//2 (when B > 1) so the 'parallel' grid axis always has >=2
    steps and both v7x TensorCores get work; counts the double-buffered I/O
    blocks and the resident weights, consistent with vmem_limit_bytes.
    """
    HC = n_head * C
    max_bblk = B // 2 if B > 1 else 1
    best = 1
    for bblk in range(1, max_bblk + 1):
        if B % bblk:
            continue
        rows = bblk * T
        kv = min(kv_block, T)
        act_bytes = 4 * (6 * rows * C                    # x/h1/sa/x1/h2/out temps (f32)
                         + 3 * rows * HC                 # fused qkv
                         + bblk * n_head * T * kv        # score chunk
                         + 2 * bblk * n_head * T * C     # acc / att
                         + 4 * rows * C)                 # FFN hidden
        io_bytes = 2 * 2 * rows * C * io_itemsize        # double-buffered in+out blocks
        if resident_bytes + act_bytes + io_bytes > vmem_budget:
            break
        best = bblk
        if rows >= target_rows:
            break
    return best


def transformer_block_pallas(x, params, *, weight_dtype=jnp.bfloat16,
                             approx_softmax_recip=True):
    """x: (B, T, C); params in PyTorch layout (Linear weights are (out, in)).

    Default fast path: bf16 weights on the MXU (native on v5e/v6e/v7x) and the
    EUP approximate reciprocal for the softmax denominator.  Pass
    weight_dtype=jnp.float32, approx_softmax_recip=False for tight numerics.
    """
    B, T, C = x.shape
    H = params['n_head']
    HC = H * C

    # Fuse per-head q/k/v weights into one (C, 3*H*C) matrix.
    # Column layout: [ all-head Q | all-head K | all-head V ], head-major.
    wq_t = jnp.concatenate([w.T for w in params['wq']], axis=1)       # (C, HC)
    wk_t = jnp.concatenate([w.T for w in params['wk']], axis=1)
    wv_t = jnp.concatenate([w.T for w in params['wv']], axis=1)
    w_qkv = jnp.concatenate([wq_t, wk_t, wv_t], axis=1).astype(weight_dtype)
    w_proj = params['w_proj'].T.astype(weight_dtype)                  # (HC, C)
    w_ff1 = params['w_ff1'].T.astype(weight_dtype)                    # (C, 4C)
    w_ff2 = params['w_ff2'].T.astype(weight_dtype)                    # (4C, C)

    f32 = jnp.float32
    b_proj = params['b_proj'].reshape(1, C).astype(f32)
    ln1_w = params['ln1_w'].reshape(1, C).astype(f32)
    ln1_b = params['ln1_b'].reshape(1, C).astype(f32)
    ln2_w = params['ln2_w'].reshape(1, C).astype(f32)
    ln2_b = params['ln2_b'].reshape(1, C).astype(f32)
    b_ff1 = params['b_ff1'].reshape(1, 4 * C).astype(f32)
    b_ff2 = params['b_ff2'].reshape(1, C).astype(f32)

    big_weights = (w_qkv, w_proj, w_ff1, w_ff2)
    small_params = (ln1_w, ln1_b, b_proj, ln2_w, ln2_b, b_ff1, b_ff2)
    vmem_limit = _vmem_limit_bytes()
    kv_block = min(T, 512)

    # TODO(synk): at production sizes (e.g. C=768, H=12) the fused (C, 3HC) Wqkv
    # (~85 MB f32) cannot sit whole in VMEM on any generation -- add a grid axis
    # tiling the 3HC / 4C weight-column dims (and a q-tile axis for very long T).

    def run(io_lane_dense, fused_heads, weight_buffers):
        nbytes = lambda arrs: sum(int(a.size) * a.dtype.itemsize for a in arrs)
        resident = nbytes(big_weights) * weight_buffers + nbytes(small_params) * 2
        bblk = _pick_batch_block(
            B, T, C, H, resident_bytes=resident, io_itemsize=x.dtype.itemsize,
            vmem_budget=int(vmem_limit * 0.75), kv_block=kv_block)
        grid = (B // bblk,)

        if io_lane_dense:
            # Lane-dense I/O: last block dim is T*C -> unmasked vector stores.
            x_in = x.reshape(B, 1, T * C)
            in0_spec = pl.BlockSpec((bblk, 1, T * C), lambda b: (b, 0, 0))
            out_spec = pl.BlockSpec((bblk, 1, T * C), lambda b: (b, 0, 0))
            out_shape = jax.ShapeDtypeStruct((B, 1, T * C), x.dtype)
        else:
            x_in = x
            in0_spec = pl.BlockSpec((bblk, T, C), lambda b: (b, 0, 0))
            out_spec = pl.BlockSpec((bblk, T, C), lambda b: (b, 0, 0))
            out_shape = jax.ShapeDtypeStruct((B, T, C), x.dtype)

        const2 = lambda b: (0, 0)

        def w_spec(shape):
            if weight_buffers == 1:
                # Block index never changes -> a single resident VMEM buffer.
                return pl.BlockSpec(shape, const2, pipeline_mode=pl.Buffered(1))
            return pl.BlockSpec(shape, const2)

        in_specs = [
            in0_spec,
            pl.BlockSpec((1, C), const2),        # ln1_w
            pl.BlockSpec((1, C), const2),        # ln1_b
            w_spec((C, 3 * HC)),                 # fused Wqkv^T
            w_spec((HC, C)),                     # Wproj^T
            pl.BlockSpec((1, C), const2),        # b_proj
            pl.BlockSpec((1, C), const2),        # ln2_w
            pl.BlockSpec((1, C), const2),        # ln2_b
            w_spec((C, 4 * C)),                  # Wff1^T
            pl.BlockSpec((1, 4 * C), const2),    # b_ff1
            w_spec((4 * C, C)),                  # Wff2^T
            pl.BlockSpec((1, C), const2),        # b_ff2
        ]

        args = (x_in, ln1_w, ln1_b, w_qkv, w_proj, b_proj,
                ln2_w, ln2_b, w_ff1, b_ff1, w_ff2, b_ff2)

        M = B * T
        flops = (2 * M * C * 3 * HC              # fused qkv projection
                 + 4 * H * B * T * T * C         # scores + att @ v
                 + 2 * M * HC * C                # output projection
                 + 4 * M * C * 4 * C)            # FFN (both matmuls)
        transcendentals = B * H * T * T + 2 * M  # exp + rsqrt
        in_bytes = sum(int(a.size) * a.dtype.itemsize for a in args)
        out_bytes = int(x.size) * x.dtype.itemsize

        kernel = functools.partial(
            _tblock_kernel, n_head=H, seq_len=T, kv_block=kv_block,
            fused_heads=fused_heads, approx_recip=approx_softmax_recip)

        out = pl.pallas_call(
            kernel,
            out_shape=out_shape,
            grid_spec=pltpu.PrefetchScalarGridSpec(
                num_scalar_prefetch=0,
                grid=grid,
                in_specs=in_specs,
                out_specs=out_spec,
            ),
            compiler_params=pltpu.CompilerParams(
                dimension_semantics=("parallel",),
                vmem_limit_bytes=vmem_limit,
            ),
            cost_estimate=pl.CostEstimate(flops=flops,
                                          transcendentals=transcendentals,
                                          bytes_accessed=in_bytes + out_bytes),
        )(*args)
        return jax.block_until_ready(out).reshape(B, T, C)

    # Preferred configuration first; step back only if the installed Mosaic
    # version rejects a feature (batched-head einsums / Buffered(1) /
    # lane-dense I/O).  The last config mirrors the previously-validated one.
    configs = (
        dict(io_lane_dense=True, fused_heads=True, weight_buffers=1),
        dict(io_lane_dense=True, fused_heads=True, weight_buffers=2),
        dict(io_lane_dense=True, fused_heads=False, weight_buffers=2),
        dict(io_lane_dense=False, fused_heads=False, weight_buffers=2),
    )
    for cfg in configs[:-1]:
        try:
            return run(**cfg)
        except Exception:
            continue
    return run(**configs[-1])


# ---------------------------------------------------------------------------
# Pure-JAX reference mirroring the PyTorch forward, and deterministic init.
# ---------------------------------------------------------------------------
def transformer_block_reference(x, params):
    def ln(v, w, b):
        mu = jnp.mean(v, axis=-1, keepdims=True)
        var = jnp.mean((v - mu) ** 2, axis=-1, keepdims=True)
        return (v - mu) * jax.lax.rsqrt(var + _LN_EPS) * w + b

    h = ln(x, params['ln1_w'], params['ln1_b'])
    heads = []
    for wq, wk, wv in zip(params['wq'], params['wk'], params['wv']):
        q = h @ wq.T
        k = h @ wk.T
        v = h @ wv.T
        att = (q @ jnp.swapaxes(k, -2, -1)) * (1.0 / math.sqrt(k.shape[-1]))
        att = jax.nn.softmax(att, axis=-1)
        heads.append(att @ v)
    sa = jnp.concatenate(heads, axis=-1) @ params['w_proj'].T + params['b_proj']
    x = x + sa
    h2 = ln(x, params['ln2_w'], params['ln2_b'])
    ff = jnp.maximum(h2 @ params['w_ff1'].T + params['b_ff1'], 0.0)
    ff = ff @ params['w_ff2'].T + params['b_ff2']
    return x + ff


def init_params(key, n_embd, n_head):
    C, H = n_embd, n_head
    keys = iter(jax.random.split(key, 3 * H + 8))

    def u(k, shape, fan_in):
        bound = 1.0 / math.sqrt(fan_in)
        return jax.random.uniform(k, shape, jnp.float32, -bound, bound)

    return {
        'n_head': H,
        'wq': [u(next(keys), (C, C), C) for _ in range(H)],       # (out, in)
        'wk': [u(next(keys), (C, C), C) for _ in range(H)],
        'wv': [u(next(keys), (C, C), C) for _ in range(H)],
        'w_proj': u(next(keys), (C, H * C), H * C),               # (out, in)
        'b_proj': u(next(keys), (C,), H * C),
        'ln1_w': jnp.ones((C,), jnp.float32),
        'ln1_b': jnp.zeros((C,), jnp.float32),
        'ln2_w': jnp.ones((C,), jnp.float32),
        'ln2_b': jnp.zeros((C,), jnp.float32),
        'w_ff1': u(next(keys), (4 * C, C), C),                    # (out, in)
        'b_ff1': u(next(keys), (4 * C,), C),
        'w_ff2': u(next(keys), (C, 4 * C), 4 * C),                # (out, in)
        'b_ff2': u(next(keys), (C,), 4 * C),
    }


if __name__ == "__main__":
    B, T, C, H = 2, 8, 32, 4   # batch, seq, n_embd, n_head

    key = jax.random.PRNGKey(0)
    kx, kp = jax.random.split(key)
    x = jax.random.normal(kx, (B, T, C), dtype=jnp.float32)
    params = init_params(kp, C, H)

    ref = transformer_block_reference(x, params)

    # Exact path (f32 weights, exact reciprocal): tight correctness gate.
    out_f32 = transformer_block_pallas(x, params, weight_dtype=jnp.float32,
                                       approx_softmax_recip=False)
    out_f32 = jax.block_until_ready(out_f32)
    assert out_f32.shape == (B, T, C)
    err_f32 = float(jnp.max(jnp.abs(out_f32 - ref)))
    assert jnp.allclose(out_f32, ref, atol=2e-4, rtol=2e-4), \
        f"f32 mismatch vs reference (max abs err {err_f32})"

    # Default fast path (bf16 weights on the MXU + EUP approx reciprocal),
    # checked at a bf16-appropriate tolerance.
    out_fast = jax.block_until_ready(transformer_block_pallas(x, params))
    err_fast = float(jnp.max(jnp.abs(out_fast - ref)))
    assert jnp.allclose(out_fast, ref, atol=5e-2, rtol=5e-2), \
        f"bf16 mismatch vs reference (max abs err {err_fast})"

    print("KERNEL_OK")
</pallas_src>

<mosaic_0001>
module attributes {stable_mosaic.version = 11 : i64} {
  func.func @_tblock_kernel(%arg0: i32, %arg1: memref<1x1x256xf32, #tpu.memory_space<vmem>>, %arg2: memref<1x32xf32, #tpu.memory_space<vmem>>, %arg3: memref<1x32xf32, #tpu.memory_space<vmem>>, %arg4: memref<32x384xf32, #tpu.memory_space<vmem>>, %arg5: memref<128x32xf32, #tpu.memory_space<vmem>>, %arg6: memref<1x32xf32, #tpu.memory_space<vmem>>, %arg7: memref<1x32xf32, #tpu.memory_space<vmem>>, %arg8: memref<1x32xf32, #tpu.memory_space<vmem>>, %arg9: memref<32x128xf32, #tpu.memory_space<vmem>>, %arg10: memref<1x128xf32, #tpu.memory_space<vmem>>, %arg11: memref<128x32xf32, #tpu.memory_space<vmem>>, %arg12: memref<1x32xf32, #tpu.memory_space<vmem>>, %arg13: memref<1x1x256xf32, #tpu.memory_space<vmem>>) attributes {dimension_semantics = [#tpu.dimension_semantics<parallel>], iteration_bounds = array<i64: 2>, scalar_prefetch = 0 : i64, scratch_operands = 0 : i64, tpu.core_type = #tpu.core_type<tc>, window_params = [{transform_indices = @transform_0, window_bounds = array<i64: 1, 1, 256>}, {pipeline_mode = #tpu.pipeline_mode<synchronous>, transform_indices = @transform_1, window_bounds = array<i64: 1, 32>}, {pipeline_mode = #tpu.pipeline_mode<synchronous>, transform_indices = @transform_2, window_bounds = array<i64: 1, 32>}, {pipeline_mode = #tpu.pipeline_mode<synchronous>, transform_indices = @transform_3, window_bounds = array<i64: 32, 384>}, {pipeline_mode = #tpu.pipeline_mode<synchronous>, transform_indices = @transform_4, window_bounds = array<i64: 128, 32>}, {pipeline_mode = #tpu.pipeline_mode<synchronous>, transform_indices = @transform_5, window_bounds = array<i64: 1, 32>}, {pipeline_mode = #tpu.pipeline_mode<synchronous>, transform_indices = @transform_6, window_bounds = array<i64: 1, 32>}, {pipeline_mode = #tpu.pipeline_mode<synchronous>, transform_indices = @transform_7, window_bounds = array<i64: 1, 32>}, {pipeline_mode = #tpu.pipeline_mode<synchronous>, transform_indices = @transform_8, window_bounds = array<i64: 32, 128>}, {pipeline_mode = #tpu.pipeline_mode<synchronous>, transform_indices = @transform_9, window_bounds = array<i64: 1, 128>}, {pipeline_mode = #tpu.pipeline_mode<synchronous>, transform_indices = @transform_10, window_bounds = array<i64: 128, 32>}, {pipeline_mode = #tpu.pipeline_mode<synchronous>, transform_indices = @transform_11, window_bounds = array<i64: 1, 32>}, {transform_indices = @transform_12, window_bounds = array<i64: 1, 1, 256>}]} {
    %c0 = arith.constant 0 : index
    %c0_0 = arith.constant 0 : index
    %c0_1 = arith.constant 0 : index
    %0 = vector.load %arg1[%c0, %c0_0, %c0_1] : memref<1x1x256xf32, #tpu.memory_space<vmem>>, vector<1x1x256xf32>
    %1 = vector.shape_cast %0 : vector<1x1x256xf32> to vector<8x32xf32>
    %c0_2 = arith.constant 0 : index
    %c0_3 = arith.constant 0 : index
    %2 = vector.load %arg2[%c0_2, %c0_3] : memref<1x32xf32, #tpu.memory_space<vmem>>, vector<1x32xf32>
    %c0_4 = arith.constant 0 : index
    %c0_5 = arith.constant 0 : index
    %3 = vector.load %arg3[%c0_4, %c0_5] : memref<1x32xf32, #tpu.memory_space<vmem>>, vector<1x32xf32>
    %cst = arith.constant dense<0.000000e+00> : vector<8xf32>
    %4 = vector.multi_reduction <add>, %1, %cst [1] : vector<8x32xf32> to vector<8xf32>
    %5 = vector.shape_cast %4 : vector<8xf32> to vector<8x1xf32>
    %cst_6 = arith.constant 3.200000e+01 : f32
    %6 = vector.broadcast %cst_6 : f32 to vector<8x1xf32>
    %7 = arith.divf %5, %6 : vector<8x1xf32>
    %8 = vector.broadcast %7 : vector<8x1xf32> to vector<8x32xf32>
    %9 = arith.subf %1, %8 : vector<8x32xf32>
    %10 = arith.mulf %9, %9 : vector<8x32xf32>
    %cst_7 = arith.constant dense<0.000000e+00> : vector<8xf32>
    %11 = vector.multi_reduction <add>, %10, %cst_7 [1] : vector<8x32xf32> to vector<8xf32>
    %12 = vector.shape_cast %11 : vector<8xf32> to vector<8x1xf32>
    %cst_8 = arith.constant 3.200000e+01 : f32
    %13 = vector.broadcast %cst_8 : f32 to vector<8x1xf32>
    %14 = arith.divf %12, %13 : vector<8x1xf32>
    %cst_9 = arith.constant 9.99999974E-6 : f32
    %15 = vector.broadcast %cst_9 : f32 to vector<8x1xf32>
    %16 = arith.addf %14, %15 : vector<8x1xf32>
    %17 = math.rsqrt %16 : vector<8x1xf32>
    %18 = vector.broadcast %17 : vector<8x1xf32> to vector<8x32xf32>
    %19 = arith.mulf %9, %18 : vector<8x32xf32>
    %20 = vector.broadcast %2 : vector<1x32xf32> to vector<8x32xf32>
    %21 = arith.mulf %19, %20 : vector<8x32xf32>
    %22 = vector.broadcast %3 : vector<1x32xf32> to vector<8x32xf32>
    %23 = arith.addf %21, %22 : vector<8x32xf32>
    %c0_10 = arith.constant 0 : index
    %c0_11 = arith.constant 0 : index
    %24 = vector.load %arg4[%c0_10, %c0_11] : memref<32x384xf32, #tpu.memory_space<vmem>>, vector<32x384xf32>
    %cst_12 = arith.constant dense<0.000000e+00> : vector<8x384xf32>
    %25 = tpu.matmul %23, %24, %cst_12 {dimension_numbers = #tpu.dot_dimension_numbers<[1], [0], [0], [1], [0, 0, 1, 1], [], []>} : vector<8x32xf32>, vector<32x384xf32>, vector<8x384xf32> -> vector<8x384xf32>
    %26 = vector.extract_strided_slice %25 {offsets = [0, 0], sizes = [8, 128], strides = [1, 1]} : vector<8x384xf32> to vector<8x128xf32>
    %cst_13 = arith.constant 0.176776692 : f32
    %27 = vector.broadcast %cst_13 : f32 to vector<8x128xf32>
    %28 = arith.mulf %26, %27 : vector<8x128xf32>
    %29 = vector.extract_strided_slice %25 {offsets = [0, 128], sizes = [8, 128], strides = [1, 1]} : vector<8x384xf32> to vector<8x128xf32>
    %30 = vector.extract_strided_slice %25 {offsets = [0, 256], sizes = [8, 128], strides = [1, 1]} : vector<8x384xf32> to vector<8x128xf32>
    %31 = vector.extract_strided_slice %28 {offsets = [0, 0], sizes = [8, 32], strides = [1, 1]} : vector<8x128xf32> to vector<8x32xf32>
    %32 = vector.shape_cast %31 : vector<8x32xf32> to vector<1x8x32xf32>
    %33 = vector.extract_strided_slice %29 {offsets = [0, 0], sizes = [8, 32], strides = [1, 1]} : vector<8x128xf32> to vector<8x32xf32>
    %34 = vector.shape_cast %33 : vector<8x32xf32> to vector<1x8x32xf32>
    %35 = vector.extract_strided_slice %30 {offsets = [0, 0], sizes = [8, 32], strides = [1, 1]} : vector<8x128xf32> to vector<8x32xf32>
    %36 = vector.shape_cast %35 : vector<8x32xf32> to vector<1x8x32xf32>
    "tpu.trace_start"() <{level = 10 : i32, message = "btc,bsc->bts"}> : () -> ()
    %cst_14 = arith.constant dense<0.000000e+00> : vector<1x8x8xf32>
    %37 = tpu.matmul %32, %34, %cst_14 {dimension_numbers = #tpu.dot_dimension_numbers<[2], [2], [1], [1], [0, 0, 0, 1, 1, 1], [0], [0]>} : vector<1x8x32xf32>, vector<1x8x32xf32>, vector<1x8x8xf32> -> vector<1x8x8xf32>
    "tpu.trace_stop"() : () -> ()
    %cst_15 = arith.constant dense<0xFF800000> : vector<1x8xf32>
    %38 = vector.multi_reduction <maximumf>, %37, %cst_15 [2] : vector<1x8x8xf32> to vector<1x8xf32>
    %39 = vector.shape_cast %38 : vector<1x8xf32> to vector<1x8x1xf32>
    %40 = vector.broadcast %39 : vector<1x8x1xf32> to vector<1x8x8xf32>
    %41 = arith.subf %37, %40 : vector<1x8x8xf32>
    %42 = math.exp %41 : vector<1x8x8xf32>
    %cst_16 = arith.constant dense<0.000000e+00> : vector<1x8xf32>
    %43 = vector.multi_reduction <add>, %42, %cst_16 [2] : vector<1x8x8xf32> to vector<1x8xf32>
    %44 = vector.shape_cast %43 : vector<1x8xf32> to vector<1x8x1xf32>
    %45 = tpu.reciprocal %44 : vector<1x8x1xf32> -> vector<1x8x1xf32>
    %46 = vector.broadcast %45 : vector<1x8x1xf32> to vector<1x8x8xf32>
    %47 = arith.mulf %42, %46 : vector<1x8x8xf32>
    "tpu.trace_start"() <{level = 10 : i32, message = "bts,bsc->btc"}> : () -> ()
    %cst_17 = arith.constant dense<0.000000e+00> : vector<1x8x32xf32>
    %48 = tpu.matmul %47, %36, %cst_17 {dimension_numbers = #tpu.dot_dimension_numbers<[2], [1], [1], [2], [0, 0, 0, 1, 1, 2], [0], [0]>} : vector<1x8x8xf32>, vector<1x8x32xf32>, vector<1x8x32xf32> -> vector<1x8x32xf32>
    "tpu.trace_stop"() : () -> ()
    %49 = vector.extract_strided_slice %28 {offsets = [0, 32], sizes = [8, 32], strides = [1, 1]} : vector<8x128xf32> to vector<8x32xf32>
    %50 = vector.shape_cast %49 : vector<8x32xf32> to vector<1x8x32xf32>
    %51 = vector.extract_strided_slice %29 {offsets = [0, 32], sizes = [8, 32], strides = [1, 1]} : vector<8x128xf32> to vector<8x32xf32>
    %52 = vector.shape_cast %51 : vector<8x32xf32> to vector<1x8x32xf32>
    %53 = vector.extract_strided_slice %30 {offsets = [0, 32], sizes = [8, 32], strides = [1, 1]} : vector<8x128xf32> to vector<8x32xf32>
    %54 = vector.shape_cast %53 : vector<8x32xf32> to vector<1x8x32xf32>
    "tpu.trace_start"() <{level = 10 : i32, message = "btc,bsc->bts"}> : () -> ()
    %cst_18 = arith.constant dense<0.000000e+00> : vector<1x8x8xf32>
    %55 = tpu.matmul %50, %52, %cst_18 {dimension_numbers = #tpu.dot_dimension_numbers<[2], [2], [1], [1], [0, 0, 0, 1, 1, 1], [0], [0]>} : vector<1x8x32xf32>, vector<1x8x32xf32>, vector<1x8x8xf32> -> vector<1x8x8xf32>
    "tpu.trace_stop"() : () -> ()
    %cst_19 = arith.constant dense<0xFF800000> : vector<1x8xf32>
    %56 = vector.multi_reduction <maximumf>, %55, %cst_19 [2] : vector<1x8x8xf32> to vector<1x8xf32>
    %57 = vector.shape_cast %56 : vector<1x8xf32> to vector<1x8x1xf32>
    %58 = vector.broadcast %57 : vector<1x8x1xf32> to vector<1x8x8xf32>
    %59 = arith.subf %55, %58 : vector<1x8x8xf32>
    %60 = math.exp %59 : vector<1x8x8xf32>
    %cst_20 = arith.constant dense<0.000000e+00> : vector<1x8xf32>
    %61 = vector.multi_reduction <add>, %60, %cst_20 [2] : vector<1x8x8xf32> to vector<1x8xf32>
    %62 = vector.shape_cast %61 : vector<1x8xf32> to vector<1x8x1xf32>
    %63 = tpu.reciprocal %62 : vector<1x8x1xf32> -> vector<1x8x1xf32>
    %64 = vector.broadcast %63 : vector<1x8x1xf32> to vector<1x8x8xf32>
    %65 = arith.mulf %60, %64 : vector<1x8x8xf32>
    "tpu.trace_start"() <{level = 10 : i32, message = "bts,bsc->btc"}> : () -> ()
    %cst_21 = arith.constant dense<0.000000e+00> : vector<1x8x32xf32>
    %66 = tpu.matmul %65, %54, %cst_21 {dimension_numbers = #tpu.dot_dimension_numbers<[2], [1], [1], [2], [0, 0, 0, 1, 1, 2], [0], [0]>} : vector<1x8x8xf32>, vector<1x8x32xf32>, vector<1x8x32xf32> -> vector<1x8x32xf32>
    "tpu.trace_stop"() : () -> ()
    %67 = vector.extract_strided_slice %28 {offsets = [0, 64], sizes = [8, 32], strides = [1, 1]} : vector<8x128xf32> to vector<8x32xf32>
    %68 = vector.shape_cast %67 : vector<8x32xf32> to vector<1x8x32xf32>
    %69 = vector.extract_strided_slice %29 {offsets = [0, 64], sizes = [8, 32], strides = [1, 1]} : vector<8x128xf32> to vector<8x32xf32>
    %70 = vector.shape_cast %69 : vector<8x32xf32> to vector<1x8x32xf32>
    %71 = vector.extract_strided_slice %30 {offsets = [0, 64], sizes = [8, 32], strides = [1, 1]} : vector<8x128xf32> to vector<8x32xf32>
    %72 = vector.shape_cast %71 : vector<8x32xf32> to vector<1x8x32xf32>
    "tpu.trace_start"() <{level = 10 : i32, message = "btc,bsc->bts"}> : () -> ()
    %cst_22 = arith.constant dense<0.000000e+00> : vector<1x8x8xf32>
    %73 = tpu.matmul %68, %70, %cst_22 {dimension_numbers = #tpu.dot_dimension_numbers<[2], [2], [1], [1], [0, 0, 0, 1, 1, 1], [0], [0]>} : vector<1x8x32xf32>, vector<1x8x32xf32>, vector<1x8x8xf32> -> vector<1x8x8xf32>
    "tpu.trace_stop"() : () -> ()
    %cst_23 = arith.constant dense<0xFF800000> : vector<1x8xf32>
    %74 = vector.multi_reduction <maximumf>, %73, %cst_23 [2] : vector<1x8x8xf32> to vector<1x8xf32>
    %75 = vector.shape_cast %74 : vector<1x8xf32> to vector<1x8x1xf32>
    %76 = vector.broadcast %75 : vector<1x8x1xf32> to vector<1x8x8xf32>
    %77 = arith.subf %73, %76 : vector<1x8x8xf32>
    %78 = math.exp %77 : vector<1x8x8xf32>
    %cst_24 = arith.constant dense<0.000000e+00> : vector<1x8xf32>
    %79 = vector.multi_reduction <add>, %78, %cst_24 [2] : vector<1x8x8xf32> to vector<1x8xf32>
    %80 = vector.shape_cast %79 : vector<1x8xf32> to vector<1x8x1xf32>
    %81 = tpu.reciprocal %80 : vector<1x8x1xf32> -> vector<1x8x1xf32>
    %82 = vector.broadcast %81 : vector<1x8x1xf32> to vector<1x8x8xf32>
    %83 = arith.mulf %78, %82 : vector<1x8x8xf32>
    "tpu.trace_start"() <{level = 10 : i32, message = "bts,bsc->btc"}> : () -> ()
    %cst_25 = arith.constant dense<0.000000e+00> : vector<1x8x32xf32>
    %84 = tpu.matmul %83, %72, %cst_25 {dimension_numbers = #tpu.dot_dimension_numbers<[2], [1], [1], [2], [0, 0, 0, 1, 1, 2], [0], [0]>} : vector<1x8x8xf32>, vector<1x8x32xf32>, vector<1x8x32xf32> -> vector<1x8x32xf32>
    "tpu.trace_stop"() : () -> ()
    %85 = vector.extract_strided_slice %28 {offsets = [0, 96], sizes = [8, 32], strides = [1, 1]} : vector<8x128xf32> to vector<8x32xf32>
    %86 = vector.shape_cast %85 : vector<8x32xf32> to vector<1x8x32xf32>
    %87 = vector.extract_strided_slice %29 {offsets = [0, 96], sizes = [8, 32], strides = [1, 1]} : vector<8x128xf32> to vector<8x32xf32>
    %88 = vector.shape_cast %87 : vector<8x32xf32> to vector<1x8x32xf32>
    %89 = vector.extract_strided_slice %30 {offsets = [0, 96], sizes = [8, 32], strides = [1, 1]} : vector<8x128xf32> to vector<8x32xf32>
    %90 = vector.shape_cast %89 : vector<8x32xf32> to vector<1x8x32xf32>
    "tpu.trace_start"() <{level = 10 : i32, message = "btc,bsc->bts"}> : () -> ()
    %cst_26 = arith.constant dense<0.000000e+00> : vector<1x8x8xf32>
    %91 = tpu.matmul %86, %88, %cst_26 {dimension_numbers = #tpu.dot_dimension_numbers<[2], [2], [1], [1], [0, 0, 0, 1, 1, 1], [0], [0]>} : vector<1x8x32xf32>, vector<1x8x32xf32>, vector<1x8x8xf32> -> vector<1x8x8xf32>
    "tpu.trace_stop"() : () -> ()
    %cst_27 = arith.constant dense<0xFF800000> : vector<1x8xf32>
    %92 = vector.multi_reduction <maximumf>, %91, %cst_27 [2] : vector<1x8x8xf32> to vector<1x8xf32>
    %93 = vector.shape_cast %92 : vector<1x8xf32> to vector<1x8x1xf32>
    %94 = vector.broadcast %93 : vector<1x8x1xf32> to vector<1x8x8xf32>
    %95 = arith.subf %91, %94 : vector<1x8x8xf32>
    %96 = math.exp %95 : vector<1x8x8xf32>
    %cst_28 = arith.constant dense<0.000000e+00> : vector<1x8xf32>
    %97 = vector.multi_reduction <add>, %96, %cst_28 [2] : vector<1x8x8xf32> to vector<1x8xf32>
    %98 = vector.shape_cast %97 : vector<1x8xf32> to vector<1x8x1xf32>
    %99 = tpu.reciprocal %98 : vector<1x8x1xf32> -> vector<1x8x1xf32>
    %100 = vector.broadcast %99 : vector<1x8x1xf32> to vector<1x8x8xf32>
    %101 = arith.mulf %96, %100 : vector<1x8x8xf32>
    "tpu.trace_start"() <{level = 10 : i32, message = "bts,bsc->btc"}> : () -> ()
    %cst_29 = arith.constant dense<0.000000e+00> : vector<1x8x32xf32>
    %102 = tpu.matmul %101, %90, %cst_29 {dimension_numbers = #tpu.dot_dimension_numbers<[2], [1], [1], [2], [0, 0, 0, 1, 1, 2], [0], [0]>} : vector<1x8x8xf32>, vector<1x8x32xf32>, vector<1x8x32xf32> -> vector<1x8x32xf32>
    "tpu.trace_stop"() : () -> ()
    %103 = tpu.concatenate %48, %66, %84, %102 in 2 : vector<1x8x32xf32>, vector<1x8x32xf32>, vector<1x8x32xf32>, vector<1x8x32xf32> -> vector<1x8x128xf32>
    %104 = vector.shape_cast %103 : vector<1x8x128xf32> to vector<8x128xf32>
    %c0_30 = arith.constant 0 : index
    %c0_31 = arith.constant 0 : index
    %105 = vector.load %arg5[%c0_30, %c0_31] : memref<128x32xf32, #tpu.memory_space<vmem>>, vector<128x32xf32>
    %cst_32 = arith.constant dense<0.000000e+00> : vector<8x32xf32>
    %106 = tpu.matmul %104, %105, %cst_32 {dimension_numbers = #tpu.dot_dimension_numbers<[1], [0], [0], [1], [0, 0, 1, 1], [], []>} : vector<8x128xf32>, vector<128x32xf32>, vector<8x32xf32> -> vector<8x32xf32>
    %c0_33 = arith.constant 0 : index
    %c0_34 = arith.constant 0 : index
    %107 = vector.load %arg6[%c0_33, %c0_34] : memref<1x32xf32, #tpu.memory_space<vmem>>, vector<1x32xf32>
    %108 = vector.broadcast %107 : vector<1x32xf32> to vector<8x32xf32>
    %109 = arith.addf %106, %108 : vector<8x32xf32>
    %110 = arith.addf %1, %109 : vector<8x32xf32>
    %c0_35 = arith.constant 0 : index
    %c0_36 = arith.constant 0 : index
    %111 = vector.load %arg7[%c0_35, %c0_36] : memref<1x32xf32, #tpu.memory_space<vmem>>, vector<1x32xf32>
    %c0_37 = arith.constant 0 : index
    %c0_38 = arith.constant 0 : index
    %112 = vector.load %arg8[%c0_37, %c0_38] : memref<1x32xf32, #tpu.memory_space<vmem>>, vector<1x32xf32>
    %cst_39 = arith.constant dense<0.000000e+00> : vector<8xf32>
    %113 = vector.multi_reduction <add>, %110, %cst_39 [1] : vector<8x32xf32> to vector<8xf32>
    %114 = vector.shape_cast %113 : vector<8xf32> to vector<8x1xf32>
    %cst_40 = arith.constant 3.200000e+01 : f32
    %115 = vector.broadcast %cst_40 : f32 to vector<8x1xf32>
    %116 = arith.divf %114, %115 : vector<8x1xf32>
    %117 = vector.broadcast %116 : vector<8x1xf32> to vector<8x32xf32>
    %118 = arith.subf %110, %117 : vector<8x32xf32>
    %119 = arith.mulf %118, %118 : vector<8x32xf32>
    %cst_41 = arith.constant dense<0.000000e+00> : vector<8xf32>
    %120 = vector.multi_reduction <add>, %119, %cst_41 [1] : vector<8x32xf32> to vector<8xf32>
    %121 = vector.shape_cast %120 : vector<8xf32> to vector<8x1xf32>
    %cst_42 = arith.constant 3.200000e+01 : f32
    %122 = vector.broadcast %cst_42 : f32 to vector<8x1xf32>
    %123 = arith.divf %121, %122 : vector<8x1xf32>
    %cst_43 = arith.constant 9.99999974E-6 : f32
    %124 = vector.broadcast %cst_43 : f32 to vector<8x1xf32>
    %125 = arith.addf %123, %124 : vector<8x1xf32>
    %126 = math.rsqrt %125 : vector<8x1xf32>
    %127 = vector.broadcast %126 : vector<8x1xf32> to vector<8x32xf32>
    %128 = arith.mulf %118, %127 : vector<8x32xf32>
    %129 = vector.broadcast %111 : vector<1x32xf32> to vector<8x32xf32>
    %130 = arith.mulf %128, %129 : vector<8x32xf32>
    %131 = vector.broadcast %112 : vector<1x32xf32> to vector<8x32xf32>
    %132 = arith.addf %130, %131 : vector<8x32xf32>
    %c0_44 = arith.constant 0 : index
    %c0_45 = arith.constant 0 : index
    %133 = vector.load %arg9[%c0_44, %c0_45] : memref<32x128xf32, #tpu.memory_space<vmem>>, vector<32x128xf32>
    %cst_46 = arith.constant dense<0.000000e+00> : vector<8x128xf32>
    %134 = tpu.matmul %132, %133, %cst_46 {dimension_numbers = #tpu.dot_dimension_numbers<[1], [0], [0], [1], [0, 0, 1, 1], [], []>} : vector<8x32xf32>, vector<32x128xf32>, vector<8x128xf32> -> vector<8x128xf32>
    %c0_47 = arith.constant 0 : index
    %c0_48 = arith.constant 0 : index
    %135 = vector.load %arg10[%c0_47, %c0_48] : memref<1x128xf32, #tpu.memory_space<vmem>>, vector<1x128xf32>
    %136 = vector.broadcast %135 : vector<1x128xf32> to vector<8x128xf32>
    %137 = arith.addf %134, %136 : vector<8x128xf32>
    %cst_49 = arith.constant 0.000000e+00 : f32
    %138 = vector.broadcast %cst_49 : f32 to vector<8x128xf32>
    %139 = arith.maximumf %137, %138 : vector<8x128xf32>
    %c0_50 = arith.constant 0 : index
    %c0_51 = arith.constant 0 : index
    %140 = vector.load %arg11[%c0_50, %c0_51] : memref<128x32xf32, #tpu.memory_space<vmem>>, vector<128x32xf32>
    %cst_52 = arith.constant dense<0.000000e+00> : vector<8x32xf32>
    %141 = tpu.matmul %139, %140, %cst_52 {dimension_numbers = #tpu.dot_dimension_numbers<[1], [0], [0], [1], [0, 0, 1, 1], [], []>} : vector<8x128xf32>, vector<128x32xf32>, vector<8x32xf32> -> vector<8x32xf32>
    %c0_53 = arith.constant 0 : index
    %c0_54 = arith.constant 0 : index
    %142 = vector.load %arg12[%c0_53, %c0_54] : memref<1x32xf32, #tpu.memory_space<vmem>>, vector<1x32xf32>
    %143 = vector.broadcast %142 : vector<1x32xf32> to vector<8x32xf32>
    %144 = arith.addf %141, %143 : vector<8x32xf32>
    %145 = arith.addf %110, %144 : vector<8x32xf32>
    %146 = vector.shape_cast %145 : vector<8x32xf32> to vector<1x1x256xf32>
    %c0_55 = arith.constant 0 : index
    %c0_56 = arith.constant 0 : index
    %c0_57 = arith.constant 0 : index
    %147 = vector.load %arg13[%c0_55, %c0_56, %c0_57] : memref<1x1x256xf32, #tpu.memory_space<vmem>>, vector<1x1x256xf32>
    tpu.vector_store %arg13[%c0_55, %c0_56, %c0_57], %146 {strides = array<i32>} : memref<1x1x256xf32, #tpu.memory_space<vmem>>, vector<1x1x256xf32>,
    return
  }
  func.func @transform_0(%arg0: i32) -> (i32, i32, i32) {
    %c0_i32 = arith.constant 0 : i32
    %c0_i32_0 = arith.constant 0 : i32
    %c0_i32_1 = arith.constant 0 : i32
    return %arg0, %c0_i32, %c0_i32_0 : i32, i32, i32
  }
  func.func @transform_1(%arg0: i32) -> (i32, i32) {
    %c0_i32 = arith.constant 0 : i32
    %c0_i32_0 = arith.constant 0 : i32
    %c0_i32_1 = arith.constant 0 : i32
    return %c0_i32, %c0_i32_0 : i32, i32
  }
  func.func @transform_2(%arg0: i32) -> (i32, i32) {
    %c0_i32 = arith.constant 0 : i32
    %c0_i32_0 = arith.constant 0 : i32
    %c0_i32_1 = arith.constant 0 : i32
    return %c0_i32, %c0_i32_0 : i32, i32
  }
  func.func @transform_3(%arg0: i32) -> (i32, i32) {
    %c0_i32 = arith.constant 0 : i32
    %c0_i32_0 = arith.constant 0 : i32
    %c0_i32_1 = arith.constant 0 : i32
    return %c0_i32, %c0_i32_0 : i32, i32
  }
  func.func @transform_4(%arg0: i32) -> (i32, i32) {
    %c0_i32 = arith.constant 0 : i32
    %c0_i32_0 = arith.constant 0 : i32
    %c0_i32_1 = arith.constant 0 : i32
    return %c0_i32, %c0_i32_0 : i32, i32
  }
  func.func @transform_5(%arg0: i32) -> (i32, i32) {
    %c0_i32 = arith.constant 0 : i32
    %c0_i32_0 = arith.constant 0 : i32
    %c0_i32_1 = arith.constant 0 : i32
    return %c0_i32, %c0_i32_0 : i32, i32
  }
  func.func @transform_6(%arg0: i32) -> (i32, i32) {
    %c0_i32 = arith.constant 0 : i32
    %c0_i32_0 = arith.constant 0 : i32
    %c0_i32_1 = arith.constant 0 : i32
    return %c0_i32, %c0_i32_0 : i32, i32
  }
  func.func @transform_7(%arg0: i32) -> (i32, i32) {
    %c0_i32 = arith.constant 0 : i32
    %c0_i32_0 = arith.constant 0 : i32
    %c0_i32_1 = arith.constant 0 : i32
    return %c0_i32, %c0_i32_0 : i32, i32
  }
  func.func @transform_8(%arg0: i32) -> (i32, i32) {
    %c0_i32 = arith.constant 0 : i32
    %c0_i32_0 = arith.constant 0 : i32
    %c0_i32_1 = arith.constant 0 : i32
    return %c0_i32, %c0_i32_0 : i32, i32
  }
  func.func @transform_9(%arg0: i32) -> (i32, i32) {
    %c0_i32 = arith.constant 0 : i32
    %c0_i32_0 = arith.constant 0 : i32
    %c0_i32_1 = arith.constant 0 : i32
    return %c0_i32, %c0_i32_0 : i32, i32
  }
  func.func @transform_10(%arg0: i32) -> (i32, i32) {
    %c0_i32 = arith.constant 0 : i32
    %c0_i32_0 = arith.constant 0 : i32
    %c0_i32_1 = arith.constant 0 : i32
    return %c0_i32, %c0_i32_0 : i32, i32
  }
  func.func @transform_11(%arg0: i32) -> (i32, i32) {
    %c0_i32 = arith.constant 0 : i32
    %c0_i32_0 = arith.constant 0 : i32
    %c0_i32_1 = arith.constant 0 : i32
    return %c0_i32, %c0_i32_0 : i32, i32
  }
  func.func @transform_12(%arg0: i32) -> (i32, i32, i32) {
    %c0_i32 = arith.constant 0 : i32
    %c0_i32_0 = arith.constant 0 : i32
    %c0_i32_1 = arith.constant 0 : i32
    return %arg0, %c0_i32, %c0_i32_0 : i32, i32, i32
  }
}

module attributes {stable_mosaic.version = 11 : i64} {
  func.func @_tblock_kernel(%arg0: i32, %arg1: memref<1x8x32xf32, #tpu.memory_space<vmem>>, %arg2: memref<1x32xf32, #tpu.memory_space<vmem>>, %arg3: memref<1x32xf32, #tpu.memory_space<vmem>>, %arg4: memref<32x384xf32, #tpu.memory_space<vmem>>, %arg5: memref<128x32xf32, #tpu.memory_space<vmem>>, %arg6: memref<1x32xf32, #tpu.memory_space<vmem>>, %arg7: memref<1x32xf32, #tpu.memory_space<vmem>>, %arg8: memref<1x32xf32, #tpu.memory_space<vmem>>, %arg9: memref<32x128xf32, #tpu.memory_space<vmem>>, %arg10: memref<1x128xf32, #tpu.memory_space<vmem>>, %arg11: memref<128x32xf32, #tpu.memory_space<vmem>>, %arg12: memref<1x32xf32, #tpu.memory_space<vmem>>, %arg13: memref<1x8x32xf32, #tpu.memory_space<vmem>>) attributes {dimension_semantics = [#tpu.dimension_semantics<parallel>], iteration_bounds = array<i64: 2>, scalar_prefetch = 0 : i64, scratch_operands = 0 : i64, tpu.core_type = #tpu.core_type<tc>, window_params = [{transform_indices = @transform_0, window_bounds = array<i64: 1, 8, 32>}, {pipeline_mode = #tpu.pipeline_mode<synchronous>, transform_indices = @transform_1, window_bounds = array<i64: 1, 32>}, {pipeline_mode = #tpu.pipeline_mode<synchronous>, transform_indices = @transform_2, window_bounds = array<i64: 1, 32>}, {pipeline_mode = #tpu.pipeline_mode<synchronous>, transform_indices = @transform_3, window_bounds = array<i64: 32, 384>}, {pipeline_mode = #tpu.pipeline_mode<synchronous>, transform_indices = @transform_4, window_bounds = array<i64: 128, 32>}, {pipeline_mode = #tpu.pipeline_mode<synchronous>, transform_indices = @transform_5, window_bounds = array<i64: 1, 32>}, {pipeline_mode = #tpu.pipeline_mode<synchronous>, transform_indices = @transform_6, window_bounds = array<i64: 1, 32>}, {pipeline_mode = #tpu.pipeline_mode<synchronous>, transform_indices = @transform_7, window_bounds = array<i64: 1, 32>}, {pipeline_mode = #tpu.pipeline_mode<synchronous>, transform_indices = @transform_8, window_bounds = array<i64: 32, 128>}, {pipeline_mode = #tpu.pipeline_mode<synchronous>, transform_indices = @transform_9, window_bounds = array<i64: 1, 128>}, {pipeline_mode = #tpu.pipeline_mode<synchronous>, transform_indices = @transform_10, window_bounds = array<i64: 128, 32>}, {pipeline_mode = #tpu.pipeline_mode<synchronous>, transform_indices = @transform_11, window_bounds = array<i64: 1, 32>}, {transform_indices = @transform_12, window_bounds = array<i64: 1, 8, 32>}]} {
    %c0 = arith.constant 0 : index
    %c0_0 = arith.constant 0 : index
    %c0_1 = arith.constant 0 : index
    %0 = vector.load %arg1[%c0, %c0_0, %c0_1] : memref<1x8x32xf32, #tpu.memory_space<vmem>>, vector<1x8x32xf32>
    %1 = vector.shape_cast %0 : vector<1x8x32xf32> to vector<8x32xf32>
    %c0_2 = arith.constant 0 : index
    %c0_3 = arith.constant 0 : index
    %2 = vector.load %arg2[%c0_2, %c0_3] : memref<1x32xf32, #tpu.memory_space<vmem>>, vector<1x32xf32>
    %c0_4 = arith.constant 0 : index
    %c0_5 = arith.constant 0 : index
    %3 = vector.load %arg3[%c0_4, %c0_5] : memref<1x32xf32, #tpu.memory_space<vmem>>, vector<1x32xf32>
    %cst = arith.constant dense<0.000000e+00> : vector<8xf32>
    %4 = vector.multi_reduction <add>, %1, %cst [1] : vector<8x32xf32> to vector<8xf32>
    %5 = vector.shape_cast %4 : vector<8xf32> to vector<8x1xf32>
    %cst_6 = arith.constant 3.200000e+01 : f32
    %6 = vector.broadcast %cst_6 : f32 to vector<8x1xf32>
    %7 = arith.divf %5, %6 : vector<8x1xf32>
    %8 = vector.broadcast %7 : vector<8x1xf32> to vector<8x32xf32>
    %9 = arith.subf %1, %8 : vector<8x32xf32>
    %10 = arith.mulf %9, %9 : vector<8x32xf32>
    %cst_7 = arith.constant dense<0.000000e+00> : vector<8xf32>
    %11 = vector.multi_reduction <add>, %10, %cst_7 [1] : vector<8x32xf32> to vector<8xf32>
    %12 = vector.shape_cast %11 : vector<8xf32> to vector<8x1xf32>
    %cst_8 = arith.constant 3.200000e+01 : f32
    %13 = vector.broadcast %cst_8 : f32 to vector<8x1xf32>
    %14 = arith.divf %12, %13 : vector<8x1xf32>
    %cst_9 = arith.constant 9.99999974E-6 : f32
    %15 = vector.broadcast %cst_9 : f32 to vector<8x1xf32>
    %16 = arith.addf %14, %15 : vector<8x1xf32>
    %17 = math.rsqrt %16 : vector<8x1xf32>
    %18 = vector.broadcast %17 : vector<8x1xf32> to vector<8x32xf32>
    %19 = arith.mulf %9, %18 : vector<8x32xf32>
    %20 = vector.broadcast %2 : vector<1x32xf32> to vector<8x32xf32>
    %21 = arith.mulf %19, %20 : vector<8x32xf32>
    %22 = vector.broadcast %3 : vector<1x32xf32> to vector<8x32xf32>
    %23 = arith.addf %21, %22 : vector<8x32xf32>
    %c0_10 = arith.constant 0 : index
    %c0_11 = arith.constant 0 : index
    %24 = vector.load %arg4[%c0_10, %c0_11] : memref<32x384xf32, #tpu.memory_space<vmem>>, vector<32x384xf32>
    %cst_12 = arith.constant dense<0.000000e+00> : vector<8x384xf32>
    %25 = tpu.matmul %23, %24, %cst_12 {dimension_numbers = #tpu.dot_dimension_numbers<[1], [0], [0], [1], [0, 0, 1, 1], [], []>} : vector<8x32xf32>, vector<32x384xf32>, vector<8x384xf32> -> vector<8x384xf32>
    %26 = vector.extract_strided_slice %25 {offsets = [0, 0], sizes = [8, 128], strides = [1, 1]} : vector<8x384xf32> to vector<8x128xf32>
    %cst_13 = arith.constant 0.176776692 : f32
    %27 = vector.broadcast %cst_13 : f32 to vector<8x128xf32>
    %28 = arith.mulf %26, %27 : vector<8x128xf32>
    %29 = vector.extract_strided_slice %25 {offsets = [0, 128], sizes = [8, 128], strides = [1, 1]} : vector<8x384xf32> to vector<8x128xf32>
    %30 = vector.extract_strided_slice %25 {offsets = [0, 256], sizes = [8, 128], strides = [1, 1]} : vector<8x384xf32> to vector<8x128xf32>
    %31 = vector.extract_strided_slice %28 {offsets = [0, 0], sizes = [8, 32], strides = [1, 1]} : vector<8x128xf32> to vector<8x32xf32>
    %32 = vector.shape_cast %31 : vector<8x32xf32> to vector<1x8x32xf32>
    %33 = vector.extract_strided_slice %29 {offsets = [0, 0], sizes = [8, 32], strides = [1, 1]} : vector<8x128xf32> to vector<8x32xf32>
    %34 = vector.shape_cast %33 : vector<8x32xf32> to vector<1x8x32xf32>
    %35 = vector.extract_strided_slice %30 {offsets = [0, 0], sizes = [8, 32], strides = [1, 1]} : vector<8x128xf32> to vector<8x32xf32>
    %36 = vector.shape_cast %35 : vector<8x32xf32> to vector<1x8x32xf32>
    "tpu.trace_start"() <{level = 10 : i32, message = "btc,bsc->bts"}> : () -> ()
    %cst_14 = arith.constant dense<0.000000e+00> : vector<1x8x8xf32>
    %37 = tpu.matmul %32, %34, %cst_14 {dimension_numbers = #tpu.dot_dimension_numbers<[2], [2], [1], [1], [0, 0, 0, 1, 1, 1], [0], [0]>} : vector<1x8x32xf32>, vector<1x8x32xf32>, vector<1x8x8xf32> -> vector<1x8x8xf32>
    "tpu.trace_stop"() : () -> ()
    %cst_15 = arith.constant dense<0xFF800000> : vector<1x8xf32>
    %38 = vector.multi_reduction <maximumf>, %37, %cst_15 [2] : vector<1x8x8xf32> to vector<1x8xf32>
    %39 = vector.shape_cast %38 : vector<1x8xf32> to vector<1x8x1xf32>
    %40 = vector.broadcast %39 : vector<1x8x1xf32> to vector<1x8x8xf32>
    %41 = arith.subf %37, %40 : vector<1x8x8xf32>
    %42 = math.exp %41 : vector<1x8x8xf32>
    %cst_16 = arith.constant dense<0.000000e+00> : vector<1x8xf32>
    %43 = vector.multi_reduction <add>, %42, %cst_16 [2] : vector<1x8x8xf32> to vector<1x8xf32>
    %44 = vector.shape_cast %43 : vector<1x8xf32> to vector<1x8x1xf32>
    %45 = tpu.reciprocal %44 : vector<1x8x1xf32> -> vector<1x8x1xf32>
    %46 = vector.broadcast %45 : vector<1x8x1xf32> to vector<1x8x8xf32>
    %47 = arith.mulf %42, %46 : vector<1x8x8xf32>
    "tpu.trace_start"() <{level = 10 : i32, message = "bts,bsc->btc"}> : () -> ()
    %cst_17 = arith.constant dense<0.000000e+00> : vector<1x8x32xf32>
    %48 = tpu.matmul %47, %36, %cst_17 {dimension_numbers = #tpu.dot_dimension_numbers<[2], [1], [1], [2], [0, 0, 0, 1, 1, 2], [0], [0]>} : vector<1x8x8xf32>, vector<1x8x32xf32>, vector<1x8x32xf32> -> vector<1x8x32xf32>
    "tpu.trace_stop"() : () -> ()
    %49 = vector.extract_strided_slice %28 {offsets = [0, 32], sizes = [8, 32], strides = [1, 1]} : vector<8x128xf32> to vector<8x32xf32>
    %50 = vector.shape_cast %49 : vector<8x32xf32> to vector<1x8x32xf32>
    %51 = vector.extract_strided_slice %29 {offsets = [0, 32], sizes = [8, 32], strides = [1, 1]} : vector<8x128xf32> to vector<8x32xf32>
    %52 = vector.shape_cast %51 : vector<8x32xf32> to vector<1x8x32xf32>
    %53 = vector.extract_strided_slice %30 {offsets = [0, 32], sizes = [8, 32], strides = [1, 1]} : vector<8x128xf32> to vector<8x32xf32>
    %54 = vector.shape_cast %53 : vector<8x32xf32> to vector<1x8x32xf32>
    "tpu.trace_start"() <{level = 10 : i32, message = "btc,bsc->bts"}> : () -> ()
    %cst_18 = arith.constant dense<0.000000e+00> : vector<1x8x8xf32>
    %55 = tpu.matmul %50, %52, %cst_18 {dimension_numbers = #tpu.dot_dimension_numbers<[2], [2], [1], [1], [0, 0, 0, 1, 1, 1], [0], [0]>} : vector<1x8x32xf32>, vector<1x8x32xf32>, vector<1x8x8xf32> -> vector<1x8x8xf32>
    "tpu.trace_stop"() : () -> ()
    %cst_19 = arith.constant dense<0xFF800000> : vector<1x8xf32>
    %56 = vector.multi_reduction <maximumf>, %55, %cst_19 [2] : vector<1x8x8xf32> to vector<1x8xf32>
    %57 = vector.shape_cast %56 : vector<1x8xf32> to vector<1x8x1xf32>
    %58 = vector.broadcast %57 : vector<1x8x1xf32> to vector<1x8x8xf32>
    %59 = arith.subf %55, %58 : vector<1x8x8xf32>
    %60 = math.exp %59 : vector<1x8x8xf32>
    %cst_20 = arith.constant dense<0.000000e+00> : vector<1x8xf32>
    %61 = vector.multi_reduction <add>, %60, %cst_20 [2] : vector<1x8x8xf32> to vector<1x8xf32>
    %62 = vector.shape_cast %61 : vector<1x8xf32> to vector<1x8x1xf32>
    %63 = tpu.reciprocal %62 : vector<1x8x1xf32> -> vector<1x8x1xf32>
    %64 = vector.broadcast %63 : vector<1x8x1xf32> to vector<1x8x8xf32>
    %65 = arith.mulf %60, %64 : vector<1x8x8xf32>
    "tpu.trace_start"() <{level = 10 : i32, message = "bts,bsc->btc"}> : () -> ()
    %cst_21 = arith.constant dense<0.000000e+00> : vector<1x8x32xf32>
    %66 = tpu.matmul %65, %54, %cst_21 {dimension_numbers = #tpu.dot_dimension_numbers<[2], [1], [1], [2], [0, 0, 0, 1, 1, 2], [0], [0]>} : vector<1x8x8xf32>, vector<1x8x32xf32>, vector<1x8x32xf32> -> vector<1x8x32xf32>
    "tpu.trace_stop"() : () -> ()
    %67 = vector.extract_strided_slice %28 {offsets = [0, 64], sizes = [8, 32], strides = [1, 1]} : vector<8x128xf32> to vector<8x32xf32>
    %68 = vector.shape_cast %67 : vector<8x32xf32> to vector<1x8x32xf32>
    %69 = vector.extract_strided_slice %29 {offsets = [0, 64], sizes = [8, 32], strides = [1, 1]} : vector<8x128xf32> to vector<8x32xf32>
    %70 = vector.shape_cast %69 : vector<8x32xf32> to vector<1x8x32xf32>
    %71 = vector.extract_strided_slice %30 {offsets = [0, 64], sizes = [8, 32], strides = [1, 1]} : vector<8x128xf32> to vector<8x32xf32>
    %72 = vector.shape_cast %71 : vector<8x32xf32> to vector<1x8x32xf32>
    "tpu.trace_start"() <{level = 10 : i32, message = "btc,bsc->bts"}> : () -> ()
    %cst_22 = arith.constant dense<0.000000e+00> : vector<1x8x8xf32>
    %73 = tpu.matmul %68, %70, %cst_22 {dimension_numbers = #tpu.dot_dimension_numbers<[2], [2], [1], [1], [0, 0, 0, 1, 1, 1], [0], [0]>} : vector<1x8x32xf32>, vector<1x8x32xf32>, vector<1x8x8xf32> -> vector<1x8x8xf32>
    "tpu.trace_stop"() : () -> ()
    %cst_23 = arith.constant dense<0xFF800000> : vector<1x8xf32>
    %74 = vector.multi_reduction <maximumf>, %73, %cst_23 [2] : vector<1x8x8xf32> to vector<1x8xf32>
    %75 = vector.shape_cast %74 : vector<1x8xf32> to vector<1x8x1xf32>
    %76 = vector.broadcast %75 : vector<1x8x1xf32> to vector<1x8x8xf32>
    %77 = arith.subf %73, %76 : vector<1x8x8xf32>
    %78 = math.exp %77 : vector<1x8x8xf32>
    %cst_24 = arith.constant dense<0.000000e+00> : vector<1x8xf32>
    %79 = vector.multi_reduction <add>, %78, %cst_24 [2] : vector<1x8x8xf32> to vector<1x8xf32>
    %80 = vector.shape_cast %79 : vector<1x8xf32> to vector<1x8x1xf32>
    %81 = tpu.reciprocal %80 : vector<1x8x1xf32> -> vector<1x8x1xf32>
    %82 = vector.broadcast %81 : vector<1x8x1xf32> to vector<1x8x8xf32>
    %83 = arith.mulf %78, %82 : vector<1x8x8xf32>
    "tpu.trace_start"() <{level = 10 : i32, message = "bts,bsc->btc"}> : () -> ()
    %cst_25 = arith.constant dense<0.000000e+00> : vector<1x8x32xf32>
    %84 = tpu.matmul %83, %72, %cst_25 {dimension_numbers = #tpu.dot_dimension_numbers<[2], [1], [1], [2], [0, 0, 0, 1, 1, 2], [0], [0]>} : vector<1x8x8xf32>, vector<1x8x32xf32>, vector<1x8x32xf32> -> vector<1x8x32xf32>
    "tpu.trace_stop"() : () -> ()
    %85 = vector.extract_strided_slice %28 {offsets = [0, 96], sizes = [8, 32], strides = [1, 1]} : vector<8x128xf32> to vector<8x32xf32>
    %86 = vector.shape_cast %85 : vector<8x32xf32> to vector<1x8x32xf32>
    %87 = vector.extract_strided_slice %29 {offsets = [0, 96], sizes = [8, 32], strides = [1, 1]} : vector<8x128xf32> to vector<8x32xf32>
    %88 = vector.shape_cast %87 : vector<8x32xf32> to vector<1x8x32xf32>
    %89 = vector.extract_strided_slice %30 {offsets = [0, 96], sizes = [8, 32], strides = [1, 1]} : vector<8x128xf32> to vector<8x32xf32>
    %90 = vector.shape_cast %89 : vector<8x32xf32> to vector<1x8x32xf32>
    "tpu.trace_start"() <{level = 10 : i32, message = "btc,bsc->bts"}> : () -> ()
    %cst_26 = arith.constant dense<0.000000e+00> : vector<1x8x8xf32>
    %91 = tpu.matmul %86, %88, %cst_26 {dimension_numbers = #tpu.dot_dimension_numbers<[2], [2], [1], [1], [0, 0, 0, 1, 1, 1], [0], [0]>} : vector<1x8x32xf32>, vector<1x8x32xf32>, vector<1x8x8xf32> -> vector<1x8x8xf32>
    "tpu.trace_stop"() : () -> ()
    %cst_27 = arith.constant dense<0xFF800000> : vector<1x8xf32>
    %92 = vector.multi_reduction <maximumf>, %91, %cst_27 [2] : vector<1x8x8xf32> to vector<1x8xf32>
    %93 = vector.shape_cast %92 : vector<1x8xf32> to vector<1x8x1xf32>
    %94 = vector.broadcast %93 : vector<1x8x1xf32> to vector<1x8x8xf32>
    %95 = arith.subf %91, %94 : vector<1x8x8xf32>
    %96 = math.exp %95 : vector<1x8x8xf32>
    %cst_28 = arith.constant dense<0.000000e+00> : vector<1x8xf32>
    %97 = vector.multi_reduction <add>, %96, %cst_28 [2] : vector<1x8x8xf32> to vector<1x8xf32>
    %98 = vector.shape_cast %97 : vector<1x8xf32> to vector<1x8x1xf32>
    %99 = tpu.reciprocal %98 : vector<1x8x1xf32> -> vector<1x8x1xf32>
    %100 = vector.broadcast %99 : vector<1x8x1xf32> to vector<1x8x8xf32>
    %101 = arith.mulf %96, %100 : vector<1x8x8xf32>
    "tpu.trace_start"() <{level = 10 : i32, message = "bts,bsc->btc"}> : () -> ()
    %cst_29 = arith.constant dense<0.000000e+00> : vector<1x8x32xf32>
    %102 = tpu.matmul %101, %90, %cst_29 {dimension_numbers = #tpu.dot_dimension_numbers<[2], [1], [1], [2], [0, 0, 0, 1, 1, 2], [0], [0]>} : vector<1x8x8xf32>, vector<1x8x32xf32>, vector<1x8x32xf32> -> vector<1x8x32xf32>
    "tpu.trace_stop"() : () -> ()
    %103 = tpu.concatenate %48, %66, %84, %102 in 2 : vector<1x8x32xf32>, vector<1x8x32xf32>, vector<1x8x32xf32>, vector<1x8x32xf32> -> vector<1x8x128xf32>
    %104 = vector.shape_cast %103 : vector<1x8x128xf32> to vector<8x128xf32>
    %c0_30 = arith.constant 0 : index
    %c0_31 = arith.constant 0 : index
    %105 = vector.load %arg5[%c0_30, %c0_31] : memref<128x32xf32, #tpu.memory_space<vmem>>, vector<128x32xf32>
    %cst_32 = arith.constant dense<0.000000e+00> : vector<8x32xf32>
    %106 = tpu.matmul %104, %105, %cst_32 {dimension_numbers = #tpu.dot_dimension_numbers<[1], [0], [0], [1], [0, 0, 1, 1], [], []>} : vector<8x128xf32>, vector<128x32xf32>, vector<8x32xf32> -> vector<8x32xf32>
    %c0_33 = arith.constant 0 : index
    %c0_34 = arith.constant 0 : index
    %107 = vector.load %arg6[%c0_33, %c0_34] : memref<1x32xf32, #tpu.memory_space<vmem>>, vector<1x32xf32>
    %108 = vector.broadcast %107 : vector<1x32xf32> to vector<8x32xf32>
    %109 = arith.addf %106, %108 : vector<8x32xf32>
    %110 = arith.addf %1, %109 : vector<8x32xf32>
    %c0_35 = arith.constant 0 : index
    %c0_36 = arith.constant 0 : index
    %111 = vector.load %arg7[%c0_35, %c0_36] : memref<1x32xf32, #tpu.memory_space<vmem>>, vector<1x32xf32>
    %c0_37 = arith.constant 0 : index
    %c0_38 = arith.constant 0 : index
    %112 = vector.load %arg8[%c0_37, %c0_38] : memref<1x32xf32, #tpu.memory_space<vmem>>, vector<1x32xf32>
    %cst_39 = arith.constant dense<0.000000e+00> : vector<8xf32>
    %113 = vector.multi_reduction <add>, %110, %cst_39 [1] : vector<8x32xf32> to vector<8xf32>
    %114 = vector.shape_cast %113 : vector<8xf32> to vector<8x1xf32>
    %cst_40 = arith.constant 3.200000e+01 : f32
    %115 = vector.broadcast %cst_40 : f32 to vector<8x1xf32>
    %116 = arith.divf %114, %115 : vector<8x1xf32>
    %117 = vector.broadcast %116 : vector<8x1xf32> to vector<8x32xf32>
    %118 = arith.subf %110, %117 : vector<8x32xf32>
    %119 = arith.mulf %118, %118 : vector<8x32xf32>
    %cst_41 = arith.constant dense<0.000000e+00> : vector<8xf32>
    %120 = vector.multi_reduction <add>, %119, %cst_41 [1] : vector<8x32xf32> to vector<8xf32>
    %121 = vector.shape_cast %120 : vector<8xf32> to vector<8x1xf32>
    %cst_42 = arith.constant 3.200000e+01 : f32
    %122 = vector.broadcast %cst_42 : f32 to vector<8x1xf32>
    %123 = arith.divf %121, %122 : vector<8x1xf32>
    %cst_43 = arith.constant 9.99999974E-6 : f32
    %124 = vector.broadcast %cst_43 : f32 to vector<8x1xf32>
    %125 = arith.addf %123, %124 : vector<8x1xf32>
    %126 = math.rsqrt %125 : vector<8x1xf32>
    %127 = vector.broadcast %126 : vector<8x1xf32> to vector<8x32xf32>
    %128 = arith.mulf %118, %127 : vector<8x32xf32>
    %129 = vector.broadcast %111 : vector<1x32xf32> to vector<8x32xf32>
    %130 = arith.mulf %128, %129 : vector<8x32xf32>
    %131 = vector.broadcast %112 : vector<1x32xf32> to vector<8x32xf32>
    %132 = arith.addf %130, %131 : vector<8x32xf32>
    %c0_44 = arith.constant 0 : index
    %c0_45 = arith.constant 0 : index
    %133 = vector.load %arg9[%c0_44, %c0_45] : memref<32x128xf32, #tpu.memory_space<vmem>>, vector<32x128xf32>
    %cst_46 = arith.constant dense<0.000000e+00> : vector<8x128xf32>
    %134 = tpu.matmul %132, %133, %cst_46 {dimension_numbers = #tpu.dot_dimension_numbers<[1], [0], [0], [1], [0, 0, 1, 1], [], []>} : vector<8x32xf32>, vector<32x128xf32>, vector<8x128xf32> -> vector<8x128xf32>
    %c0_47 = arith.constant 0 : index
    %c0_48 = arith.constant 0 : index
    %135 = vector.load %arg10[%c0_47, %c0_48] : memref<1x128xf32, #tpu.memory_space<vmem>>, vector<1x128xf32>
    %136 = vector.broadcast %135 : vector<1x128xf32> to vector<8x128xf32>
    %137 = arith.addf %134, %136 : vector<8x128xf32>
    %cst_49 = arith.constant 0.000000e+00 : f32
    %138 = vector.broadcast %cst_49 : f32 to vector<8x128xf32>
    %139 = arith.maximumf %137, %138 : vector<8x128xf32>
    %c0_50 = arith.constant 0 : index
    %c0_51 = arith.constant 0 : index
    %140 = vector.load %arg11[%c0_50, %c0_51] : memref<128x32xf32, #tpu.memory_space<vmem>>, vector<128x32xf32>
    %cst_52 = arith.constant dense<0.000000e+00> : vector<8x32xf32>
    %141 = tpu.matmul %139, %140, %cst_52 {dimension_numbers = #tpu.dot_dimension_numbers<[1], [0], [0], [1], [0, 0, 1, 1], [], []>} : vector<8x128xf32>, vector<128x32xf32>, vector<8x32xf32> -> vector<8x32xf32>
    %c0_53 = arith.constant 0 : index
    %c0_54 = arith.constant 0 : index
    %142 = vector.load %arg12[%c0_53, %c0_54] : memref<1x32xf32, #tpu.memory_space<vmem>>, vector<1x32xf32>
    %143 = vector.broadcast %142 : vector<1x32xf32> to vector<8x32xf32>
    %144 = arith.addf %141, %143 : vector<8x32xf32>
    %145 = arith.addf %110, %144 : vector<8x32xf32>
    %146 = vector.shape_cast %145 : vector<8x32xf32> to vector<1x8x32xf32>
    %c0_55 = arith.constant 0 : index
    %c0_56 = arith.constant 0 : index
    %c0_57 = arith.constant 0 : index
    %147 = vector.load %arg13[%c0_55, %c0_56, %c0_57] : memref<1x8x32xf32, #tpu.memory_space<vmem>>, vector<1x8x32xf32>
    tpu.vector_store %arg13[%c0_55, %c0_56, %c0_57], %146 {strides = array<i32>} : memref<1x8x32xf32, #tpu.memory_space<vmem>>, vector<1x8x32xf32>,
    return
  }
  func.func @transform_0(%arg0: i32) -> (i32, i32, i32) {
    %c0_i32 = arith.constant 0 : i32
    %c0_i32_0 = arith.constant 0 : i32
    %c0_i32_1 = arith.constant 0 : i32
    return %arg0, %c0_i32, %c0_i32_0 : i32, i32, i32
  }
  func.func @transform_1(%arg0: i32) -> (i32, i32) {
    %c0_i32 = arith.constant 0 : i32
    %c0_i32_0 = arith.constant 0 : i32
    %c0_i32_1 = arith.constant 0 : i32
    return %c0_i32, %c0_i32_0 : i32, i32
  }
  func.func @transform_2(%arg0: i32) -> (i32, i32) {
    %c0_i32 = arith.constant 0 : i32
    %c0_i32_0 = arith.constant 0 : i32
    %c0_i32_1 = arith.constant 0 : i32
    return %c0_i32, %c0_i32_0 : i32, i32
  }
  func.func @transform_3(%arg0: i32) -> (i32, i32) {
    %c0_i32 = arith.constant 0 : i32
    %c0_i32_0 = arith.constant 0 : i32
    %c0_i32_1 = arith.constant 0 : i32
    return %c0_i32, %c0_i32_0 : i32, i32
  }
  func.func @transform_4(%arg0: i32) -> (i32, i32) {
    %c0_i32 = arith.constant 0 : i32
    %c0_i32_0 = arith.constant 0 : i32
    %c0_i32_1 = arith.constant 0 : i32
    return %c0_i32, %c0_i32_0 : i32, i32
  }
  func.func @transform_5(%arg0: i32) -> (i32, i32) {
    %c0_i32 = arith.constant 0 : i32
    %c0_i32_0 = arith.constant 0 : i32
    %c0_i32_1 = arith.constant 0 : i32
    return %c0_i32, %c0_i32_0 : i32, i32
  }
  func.func @transform_6(%arg0: i32) -> (i32, i32) {
    %c0_i32 = arith.constant 0 : i32
    %c0_i32_0 = arith.constant 0 : i32
    %c0_i32_1 = arith.constant 0 : i32
    return %c0_i32, %c0_i32_0 : i32, i32
  }
  func.func @transform_7(%arg0: i32) -> (i32, i32) {
    %c0_i32 = arith.constant 0 : i32
    %c0_i32_0 = arith.constant 0 : i32
    %c0_i32_1 = arith.constant 0 : i32
    return %c0_i32, %c0_i32_0 : i32, i32
  }
  func.func @transform_8(%arg0: i32) -> (i32, i32) {
    %c0_i32 = arith.constant 0 : i32
    %c0_i32_0 = arith.constant 0 : i32
    %c0_i32_1 = arith.constant 0 : i32
    return %c0_i32, %c0_i32_0 : i32, i32
  }
  func.func @transform_9(%arg0: i32) -> (i32, i32) {
    %c0_i32 = arith.constant 0 : i32
    %c0_i32_0 = arith.constant 0 : i32
    %c0_i32_1 = arith.constant 0 : i32
    return %c0_i32, %c0_i32_0 : i32, i32
  }
  func.func @transform_10(%arg0: i32) -> (i32, i32) {
    %c0_i32 = arith.constant 0 : i32
    %c0_i32_0 = arith.constant 0 : i32
    %c0_i32_1 = arith.constant 0 : i32
    return %c0_i32, %c0_i32_0 : i32, i32
  }
  func.func @transform_11(%arg0: i32) -> (i32, i32) {
    %c0_i32 = arith.constant 0 : i32
    %c0_i32_0 = arith.constant 0 : i32
    %c0_i32_1 = arith.constant 0 : i32
    return %c0_i32, %c0_i32_0 : i32, i32
  }
  func.func @transform_12(%arg0: i32) -> (i32, i32, i32) {
    %c0_i32 = arith.constant 0 : i32
    %c0_i32_0 = arith.constant 0 : i32
    %c0_i32_1 = arith.constant 0 : i32
    return %arg0, %c0_i32, %c0_i32_0 : i32, i32, i32
  }
}

</mosaic_0001>

<llo_original>
// kernel: tpu_custom_call.1
$region0: #{tpu_custom_call.1}
  #allocation0 [shape = 'u32[]', space=smem, size = 0x4, offset = 0x4, fixed_abs, tag = 'smem constant byte address 0x4 - core index']
  #allocation1 [shape = 'u32[144,128]{1,0:T(1,128)}', space=vmem, size = 0x12000, scoped, tag = 'internal scratch']
  %s0 = inlined_call_operand.vmem [shape: f32[2,8,32], index: 0, kind: input, shape index: {}]
  %s1 = inlined_call_operand.vmem [shape: f32[1,32], index: 1, kind: input, shape index: {}]
  %s2 = inlined_call_operand.vmem [shape: f32[1,32], index: 2, kind: input, shape index: {}]
  %s3 = inlined_call_operand.vmem [shape: f32[32,384], index: 3, kind: input, shape index: {}]
  %s4 = inlined_call_operand.vmem [shape: f32[128,32], index: 4, kind: input, shape index: {}]
  %s5 = inlined_call_operand.vmem [shape: f32[1,32], index: 5, kind: input, shape index: {}]
  %s6 = inlined_call_operand.vmem [shape: f32[1,32], index: 6, kind: input, shape index: {}]
  %s7 = inlined_call_operand.vmem [shape: f32[1,32], index: 7, kind: input, shape index: {}]
  %s8 = inlined_call_operand.vmem [shape: f32[32,128], index: 8, kind: input, shape index: {}]
  %s9 = inlined_call_operand.vmem [shape: f32[1,128], index: 9, kind: input, shape index: {}]
  %s10 = inlined_call_operand.vmem [shape: f32[128,32], index: 10, kind: input, shape index: {}]
  %s11 = inlined_call_operand.vmem [shape: f32[1,32], index: 11, kind: input, shape index: {}]
  %s12 = inlined_call_operand.hbm [shape: f32[2,8,32], index: 12, kind: output, shape index: {}]
  %s13 = sld [smem:[#allocation0]]
  $region81: #{tpu_custom_call.1} parent=0
    _
  %s15 = ssub.s32 1, %s13
  %s16 = scalar_select 0, %s15, %s13
  $region1: #{tpu_custom_call.1} parent=0
    #allocation2 [shape = 'u8[8192]{0}', space=vmem, size = 0x2000, scoped, tag = 'output window, operand 0']
    #allocation3 [shape = 's32[2]{0}', space=sflag, size = 0x8, scoped, tag = 'scoped memory for tpu_custom_call.1']
    %17 = vsyncpa [#allocation3], 0
    %s18 = scalar_lea.sflag [#allocation3], 1
    %19 = vsyncpa %s18, 0
    loop: start=0, step=1, limit=4
    $region2: #{tpu_custom_call.1} parent=1 // loop_pre_header
      _
    $region3: #{tpu_custom_call.1} parent=1 // loop_header
      %s21 = sphi 0, %s25
      %p22 = scmp.ge.s32.totalorder %s21, 4
      %s31 = sphi 0, %s33
      %s34 = sphi 0, %s31
      %s35 = sphi 0, %s34
      %s51 = sphi 0, %s35
      %s55 = sphi 0, %s55
      %s57 = sphi 0, %s55
      %s58 = sphi 0, %s57
      %s72 = sphi 0, %s58
      %s76 = sphi 0, %s76
      %s78 = sphi 0, %s76
      %s79 = sphi 0, %s78
      %s93 = sphi 0, %s79
      %s97 = sphi 0, %s97
      %s99 = sphi 0, %s97
      %s100 = sphi 0, %s99
      %s114 = sphi 0, %s100
      %s118 = sphi 0, %s118
      %s120 = sphi 0, %s118
      %s121 = sphi 0, %s120
      %s135 = sphi 0, %s121
      %s139 = sphi 0, %s139
      %s141 = sphi 0, %s139
      %s142 = sphi 0, %s141
      %s156 = sphi 0, %s142
      %s160 = sphi 0, %s160
      %s162 = sphi 0, %s160
      %s163 = sphi 0, %s162
      %s177 = sphi 0, %s163
      %s181 = sphi 0, %s181
      %s183 = sphi 0, %s181
      %s184 = sphi 0, %s183
      %s198 = sphi 0, %s184
      %s202 = sphi 0, %s202
      %s204 = sphi 0, %s202
      %s205 = sphi 0, %s204
      %s219 = sphi 0, %s205
      %s223 = sphi 0, %s223
      %s225 = sphi 0, %s223
      %s226 = sphi 0, %s225
      %s240 = sphi 0, %s226
      %s244 = sphi 0, %s244
      %s246 = sphi 0, %s244
      %s247 = sphi 0, %s246
      %s261 = sphi 0, %s247
      %s265 = sphi 0, %s265
      %s267 = sphi 0, %s265
      %s268 = sphi 0, %s267
      %s282 = sphi 0, %s268
      %s288 = sphi 0, %s290
      %s291 = sphi 0, %s288
      %s292 = sphi 0, %s291
      %s308 = sphi 0, %s292
    $region4: #{tpu_custom_call.1} parent=1 // loop_header_branch
      %24 = sbr.rel (%p22) target = $region8
    $region5: #{tpu_custom_call.1} parent=1 // loop_body
      %s26 = ssub.s32 %s21, 1
      %s27 = ssub.s32 %s21, 2
      %s28 = sadd.s32 %s21, 1
      %s29 = ssub.s32 %s21, %s28
      %p30 = scmp.eq.s32.totalorder %s29, 0
      %s32 = sadd.s32 %s31, 1
      %s33 = scalar_select %p30, %s31, %s32
      %p36 = pneg %p30
      %p37 = scmp.eq.s32.totalorder %s21, 1
      %p38 = por %p36, %p37
      %p39 = scmp.ne.s32.totalorder %s31, %s34
      %p40 = scmp.eq.s32.totalorder %s21, 0
      %p41 = por %p39, %p40
      %p42 = scmp.ne.s32.totalorder %s31, %s34
      %p43 = scmp.eq.s32.totalorder %s26, 1
      %p44 = por %p42, %p43
      %p45 = scmp.ne.s32.totalorder %s34, %s35
      %p46 = scmp.eq.s32.totalorder %s26, 0
      %p47 = por %p45, %p46
      %p48 = scmp.ne.s32.totalorder %s34, %s35
      %p49 = scmp.eq.s32.totalorder %s27, 1
      %p50 = por %p48, %p49
      %p52 = scmp.ne.s32.totalorder %s35, %s51
      %p53 = scmp.eq.s32.totalorder %s27, 0
      %p54 = por %p52, %p53
      %s56 = sadd.s32 %s55, 1
      %p59 = scmp.eq.s32.totalorder %s21, 1
      %p60 = scmp.ne.s32.totalorder %s55, %s57
      %p61 = scmp.eq.s32.totalorder %s21, 0
      %p62 = por %p60, %p61
      %p63 = scmp.ne.s32.totalorder %s55, %s57
      %p64 = scmp.eq.s32.totalorder %s26, 1
      %p65 = por %p63, %p64
      %p66 = scmp.ne.s32.totalorder %s57, %s58
      %p67 = scmp.eq.s32.totalorder %s26, 0
      %p68 = por %p66, %p67
      %p69 = scmp.ne.s32.totalorder %s57, %s58
      %p70 = scmp.eq.s32.totalorder %s27, 1
      %p71 = por %p69, %p70
      %p73 = scmp.ne.s32.totalorder %s58, %s72
      %p74 = scmp.eq.s32.totalorder %s27, 0
      %p75 = por %p73, %p74
      %s77 = sadd.s32 %s76, 1
      %p80 = scmp.eq.s32.totalorder %s21, 1
      %p81 = scmp.ne.s32.totalorder %s76, %s78
      %p82 = scmp.eq.s32.totalorder %s21, 0
      %p83 = por %p81, %p82
      %p84 = scmp.ne.s32.totalorder %s76, %s78
      %p85 = scmp.eq.s32.totalorder %s26, 1
      %p86 = por %p84, %p85
      %p87 = scmp.ne.s32.totalorder %s78, %s79
      %p88 = scmp.eq.s32.totalorder %s26, 0
      %p89 = por %p87, %p88
      %p90 = scmp.ne.s32.totalorder %s78, %s79
      %p91 = scmp.eq.s32.totalorder %s27, 1
      %p92 = por %p90, %p91
      %p94 = scmp.ne.s32.totalorder %s79, %s93
      %p95 = scmp.eq.s32.totalorder %s27, 0
      %p96 = por %p94, %p95
      %s98 = sadd.s32 %s97, 1
      %p101 = scmp.eq.s32.totalorder %s21, 1
      %p102 = scmp.ne.s32.totalorder %s97, %s99
      %p103 = scmp.eq.s32.totalorder %s21, 0
      %p104 = por %p102, %p103
      %p105 = scmp.ne.s32.totalorder %s97, %s99
      %p106 = scmp.eq.s32.totalorder %s26, 1
      %p107 = por %p105, %p106
      %p108 = scmp.ne.s32.totalorder %s99, %s100
      %p109 = scmp.eq.s32.totalorder %s26, 0
      %p110 = por %p108, %p109
      %p111 = scmp.ne.s32.totalorder %s99, %s100
      %p112 = scmp.eq.s32.totalorder %s27, 1
      %p113 = por %p111, %p112
      %p115 = scmp.ne.s32.totalorder %s100, %s114
      %p116 = scmp.eq.s32.totalorder %s27, 0
      %p117 = por %p115, %p116
      %s119 = sadd.s32 %s118, 1
      %p122 = scmp.eq.s32.totalorder %s21, 1
      %p123 = scmp.ne.s32.totalorder %s118, %s120
      %p124 = scmp.eq.s32.totalorder %s21, 0
      %p125 = por %p123, %p124
      %p126 = scmp.ne.s32.totalorder %s118, %s120
      %p127 = scmp.eq.s32.totalorder %s26, 1
      %p128 = por %p126, %p127
      %p129 = scmp.ne.s32.totalorder %s120, %s121
      %p130 = scmp.eq.s32.totalorder %s26, 0
      %p131 = por %p129, %p130
      %p132 = scmp.ne.s32.totalorder %s120, %s121
      %p133 = scmp.eq.s32.totalorder %s27, 1
      %p134 = por %p132, %p133
      %p136 = scmp.ne.s32.totalorder %s121, %s135
      %p137 = scmp.eq.s32.totalorder %s27, 0
      %p138 = por %p136, %p137
      %s140 = sadd.s32 %s139, 1
      %p143 = scmp.eq.s32.totalorder %s21, 1
      %p144 = scmp.ne.s32.totalorder %s139, %s141
      %p145 = scmp.eq.s32.totalorder %s21, 0
      %p146 = por %p144, %p145
      %p147 = scmp.ne.s32.totalorder %s139, %s141
      %p148 = scmp.eq.s32.totalorder %s26, 1
      %p149 = por %p147, %p148
      %p150 = scmp.ne.s32.totalorder %s141, %s142
      %p151 = scmp.eq.s32.totalorder %s26, 0
      %p152 = por %p150, %p151
      %p153 = scmp.ne.s32.totalorder %s141, %s142
      %p154 = scmp.eq.s32.totalorder %s27, 1
      %p155 = por %p153, %p154
      %p157 = scmp.ne.s32.totalorder %s142, %s156
      %p158 = scmp.eq.s32.totalorder %s27, 0
      %p159 = por %p157, %p158
      %s161 = sadd.s32 %s160, 1
      %p164 = scmp.eq.s32.totalorder %s21, 1
      %p165 = scmp.ne.s32.totalorder %s160, %s162
      %p166 = scmp.eq.s32.totalorder %s21, 0
      %p167 = por %p165, %p166
      %p168 = scmp.ne.s32.totalorder %s160, %s162
      %p169 = scmp.eq.s32.totalorder %s26, 1
      %p170 = por %p168, %p169
      %p171 = scmp.ne.s32.totalorder %s162, %s163
      %p172 = scmp.eq.s32.totalorder %s26, 0
      %p173 = por %p171, %p172
      %p174 = scmp.ne.s32.totalorder %s162, %s163
      %p175 = scmp.eq.s32.totalorder %s27, 1
      %p176 = por %p174, %p175
      %p178 = scmp.ne.s32.totalorder %s163, %s177
      %p179 = scmp.eq.s32.totalorder %s27, 0
      %p180 = por %p178, %p179
      %s182 = sadd.s32 %s181, 1
      %p185 = scmp.eq.s32.totalorder %s21, 1
      %p186 = scmp.ne.s32.totalorder %s181, %s183
      %p187 = scmp.eq.s32.totalorder %s21, 0
      %p188 = por %p186, %p187
      %p189 = scmp.ne.s32.totalorder %s181, %s183
      %p190 = scmp.eq.s32.totalorder %s26, 1
      %p191 = por %p189, %p190
      %p192 = scmp.ne.s32.totalorder %s183, %s184
      %p193 = scmp.eq.s32.totalorder %s26, 0
      %p194 = por %p192, %p193
      %p195 = scmp.ne.s32.totalorder %s183, %s184
      %p196 = scmp.eq.s32.totalorder %s27, 1
      %p197 = por %p195, %p196
      %p199 = scmp.ne.s32.totalorder %s184, %s198
      %p200 = scmp.eq.s32.totalorder %s27, 0
      %p201 = por %p199, %p200
      %s203 = sadd.s32 %s202, 1
      %p206 = scmp.eq.s32.totalorder %s21, 1
      %p207 = scmp.ne.s32.totalorder %s202, %s204
      %p208 = scmp.eq.s32.totalorder %s21, 0
      %p209 = por %p207, %p208
      %p210 = scmp.ne.s32.totalorder %s202, %s204
      %p211 = scmp.eq.s32.totalorder %s26, 1
      %p212 = por %p210, %p211
      %p213 = scmp.ne.s32.totalorder %s204, %s205
      %p214 = scmp.eq.s32.totalorder %s26, 0
      %p215 = por %p213, %p214
      %p216 = scmp.ne.s32.totalorder %s204, %s205
      %p217 = scmp.eq.s32.totalorder %s27, 1
      %p218 = por %p216, %p217
      %p220 = scmp.ne.s32.totalorder %s205, %s219
      %p221 = scmp.eq.s32.totalorder %s27, 0
      %p222 = por %p220, %p221
      %s224 = sadd.s32 %s223, 1
      %p227 = scmp.eq.s32.totalorder %s21, 1
      %p228 = scmp.ne.s32.totalorder %s223, %s225
      %p229 = scmp.eq.s32.totalorder %s21, 0
      %p230 = por %p228, %p229
      %p231 = scmp.ne.s32.totalorder %s223, %s225
      %p232 = scmp.eq.s32.totalorder %s26, 1
      %p233 = por %p231, %p232
      %p234 = scmp.ne.s32.totalorder %s225, %s226
      %p235 = scmp.eq.s32.totalorder %s26, 0
      %p236 = por %p234, %p235
      %p237 = scmp.ne.s32.totalorder %s225, %s226
      %p238 = scmp.eq.s32.totalorder %s27, 1
      %p239 = por %p237, %p238
      %p241 = scmp.ne.s32.totalorder %s226, %s240
      %p242 = scmp.eq.s32.totalorder %s27, 0
      %p243 = por %p241, %p242
      %s245 = sadd.s32 %s244, 1
      %p248 = scmp.eq.s32.totalorder %s21, 1
      %p249 = scmp.ne.s32.totalorder %s244, %s246
      %p250 = scmp.eq.s32.totalorder %s21, 0
      %p251 = por %p249, %p250
      %p252 = scmp.ne.s32.totalorder %s244, %s246
      %p253 = scmp.eq.s32.totalorder %s26, 1
      %p254 = por %p252, %p253
      %p255 = scmp.ne.s32.totalorder %s246, %s247
      %p256 = scmp.eq.s32.totalorder %s26, 0
      %p257 = por %p255, %p256
      %p258 = scmp.ne.s32.totalorder %s246, %s247
      %p259 = scmp.eq.s32.totalorder %s27, 1
      %p260 = por %p258, %p259
      %p262 = scmp.ne.s32.totalorder %s247, %s261
      %p263 = scmp.eq.s32.totalorder %s27, 0
      %p264 = por %p262, %p263
      %s266 = sadd.s32 %s265, 1
      %p269 = scmp.eq.s32.totalorder %s21, 1
      %p270 = scmp.ne.s32.totalorder %s265, %s267
      %p271 = scmp.eq.s32.totalorder %s21, 0
      %p272 = por %p270, %p271
      %p273 = scmp.ne.s32.totalorder %s265, %s267
      %p274 = scmp.eq.s32.totalorder %s26, 1
      %p275 = por %p273, %p274
      %p276 = scmp.ne.s32.totalorder %s267, %s268
      %p277 = scmp.eq.s32.totalorder %s26, 0
      %p278 = por %p276, %p277
      %p279 = scmp.ne.s32.totalorder %s267, %s268
      %p280 = scmp.eq.s32.totalorder %s27, 1
      %p281 = por %p279, %p280
      %p283 = scmp.ne.s32.totalorder %s268, %s282
      %p284 = scmp.eq.s32.totalorder %s27, 0
      %p285 = por %p283, %p284
      %s286 = ssub.s32 %s21, %s28
      %p287 = scmp.eq.s32.totalorder %s286, 0
      %s289 = sadd.s32 %s288, 1
      %s290 = scalar_select %p287, %s288, %s289
      %p293 = pneg %p287
      %p294 = scmp.eq.s32.totalorder %s21, 1
      %p295 = por %p293, %p294
      %p296 = scmp.ne.s32.totalorder %s288, %s291
      %p297 = scmp.eq.s32.totalorder %s21, 0
      %p298 = por %p296, %p297
      %p299 = scmp.ne.s32.totalorder %s288, %s291
      %p300 = scmp.eq.s32.totalorder %s26, 1
      %p301 = por %p299, %p300
      %p302 = scmp.ne.s32.totalorder %s291, %s292
      %p303 = scmp.eq.s32.totalorder %s26, 0
      %p304 = por %p302, %p303
      %p305 = scmp.ne.s32.totalorder %s291, %s292
      %p306 = scmp.eq.s32.totalorder %s27, 1
      %p307 = por %p305, %p306
      %p309 = scmp.ne.s32.totalorder %s292, %s308
      %p310 = scmp.eq.s32.totalorder %s27, 0
      %p311 = por %p309, %p310
      %p312 = scmp.le.s32.totalorder 1, %s21
      %p313 = scmp.lt.s32.totalorder %s21, 3
      %p314 = pnand %p312, %p313
      %p315 = pneg %p314
      // Predicated region
      $region9: #{tpu_custom_call.1} parent=5 // pred_check
        _
      $region10: #{tpu_custom_call.1} parent=5 // pred_check_branch
        %317 = sbr.rel (%p314) target = $region12
      $region11: #{tpu_custom_call.1} parent=5 // pred_region
        %s318 = ssub.s32 %s21, 1
        // Predicated region
        $region13: #{tpu_custom_call.1} parent=11 // pred_check
          %p319 = pneg %p68
        $region14: #{tpu_custom_call.1} parent=11 // pred_check_branch
          %321 = sbr.rel (%p319) target = $region16
        $region15: #{tpu_custom_call.1} parent=11 // pred_region
          _
        $region16: #{tpu_custom_call.1} parent=11 // pred_fallthru
          _
        // Predicated region
        $region17: #{tpu_custom_call.1} parent=11 // pred_check
          %p322 = pneg %p89
        $region18: #{tpu_custom_call.1} parent=11 // pred_check_branch
          %324 = sbr.rel (%p322) target = $region20
        $region19: #{tpu_custom_call.1} parent=11 // pred_region
          _
        $region20: #{tpu_custom_call.1} parent=11 // pred_fallthru
          _
        // Predicated region
        $region21: #{tpu_custom_call.1} parent=11 // pred_check
          %p325 = pneg %p110
        $region22: #{tpu_custom_call.1} parent=11 // pred_check_branch
          %327 = sbr.rel (%p325) target = $region24
        $region23: #{tpu_custom_call.1} parent=11 // pred_region
          _
        $region24: #{tpu_custom_call.1} parent=11 // pred_fallthru
          _
        // Predicated region
        $region25: #{tpu_custom_call.1} parent=11 // pred_check
          %p328 = pneg %p131
        $region26: #{tpu_custom_call.1} parent=11 // pred_check_branch
          %330 = sbr.rel (%p328) target = $region28
        $region27: #{tpu_custom_call.1} parent=11 // pred_region
          _
        $region28: #{tpu_custom_call.1} parent=11 // pred_fallthru
          _
        // Predicated region
        $region29: #{tpu_custom_call.1} parent=11 // pred_check
          %p331 = pneg %p152
        $region30: #{tpu_custom_call.1} parent=11 // pred_check_branch
          %333 = sbr.rel (%p331) target = $region32
        $region31: #{tpu_custom_call.1} parent=11 // pred_region
          _
        $region32: #{tpu_custom_call.1} parent=11 // pred_fallthru
          _
        // Predicated region
        $region33: #{tpu_custom_call.1} parent=11 // pred_check
          %p334 = pneg %p173
        $region34: #{tpu_custom_call.1} parent=11 // pred_check_branch
          %336 = sbr.rel (%p334) target = $region36
        $region35: #{tpu_custom_call.1} parent=11 // pred_region
          _
        $region36: #{tpu_custom_call.1} parent=11 // pred_fallthru
          _
        // Predicated region
        $region37: #{tpu_custom_call.1} parent=11 // pred_check
          %p337 = pneg %p194
        $region38: #{tpu_custom_call.1} parent=11 // pred_check_branch
          %339 = sbr.rel (%p337) target = $region40
        $region39: #{tpu_custom_call.1} parent=11 // pred_region
          _
        $region40: #{tpu_custom_call.1} parent=11 // pred_fallthru
          _
        // Predicated region
        $region41: #{tpu_custom_call.1} parent=11 // pred_check
          %p340 = pneg %p215
        $region42: #{tpu_custom_call.1} parent=11 // pred_check_branch
          %342 = sbr.rel (%p340) target = $region44
        $region43: #{tpu_custom_call.1} parent=11 // pred_region
          _
        $region44: #{tpu_custom_call.1} parent=11 // pred_fallthru
          _
        // Predicated region
        $region45: #{tpu_custom_call.1} parent=11 // pred_check
          %p343 = pneg %p236
        $region46: #{tpu_custom_call.1} parent=11 // pred_check_branch
          %345 = sbr.rel (%p343) target = $region48
        $region47: #{tpu_custom_call.1} parent=11 // pred_region
          _
        $region48: #{tpu_custom_call.1} parent=11 // pred_fallthru
          _
        // Predicated region
        $region49: #{tpu_custom_call.1} parent=11 // pred_check
          %p346 = pneg %p257
        $region50: #{tpu_custom_call.1} parent=11 // pred_check_branch
          %348 = sbr.rel (%p346) target = $region52
        $region51: #{tpu_custom_call.1} parent=11 // pred_region
          _
        $region52: #{tpu_custom_call.1} parent=11 // pred_fallthru
          _
        // Predicated region
        $region53: #{tpu_custom_call.1} parent=11 // pred_check
          %p349 = pneg %p278
        $region54: #{tpu_custom_call.1} parent=11 // pred_check_branch
          %351 = sbr.rel (%p349) target = $region56
        $region55: #{tpu_custom_call.1} parent=11 // pred_region
          _
        $region56: #{tpu_custom_call.1} parent=11 // pred_fallthru
          _
      $region12: #{tpu_custom_call.1} parent=5 // pred_fallthru
        _
      %p352 = scmp.lt.s32.totalorder %s21, 2
      // Predicated region
      $region57: #{tpu_custom_call.1} parent=5 // pred_check
        %p353 = pneg %p352
      $region58: #{tpu_custom_call.1} parent=5 // pred_check_branch
        %355 = sbr.rel (%p353) target = $region60
      $region59: #{tpu_custom_call.1} parent=5 // pred_region
        // Predicated region
        $region61: #{tpu_custom_call.1} parent=59 // pred_check
          %p356 = pneg %p41
        $region62: #{tpu_custom_call.1} parent=59 // pred_check_branch
          %358 = sbr.rel (%p356) target = $region64
        $region63: #{tpu_custom_call.1} parent=59 // pred_region
          %p359 = scmp.lt.s32.totalorder %s21, 1
          %s360 = scalar_select %p359, %s21, 1
          %s361 = smul.addr %s360, 8
          %s362 = scalar_lea.vmem %s0, %s361
        $region64: #{tpu_custom_call.1} parent=59 // pred_fallthru
          _
      $region60: #{tpu_custom_call.1} parent=5 // pred_fallthru
        _
      %p363 = scmp.le.s32.totalorder 1, %s21
      %p364 = scmp.lt.s32.totalorder %s21, 3
      %p365 = pnand %p363, %p364
      %p366 = pneg %p365
      // Predicated region
      $region65: #{tpu_custom_call.1} parent=5 // pred_check
        _
      $region66: #{tpu_custom_call.1} parent=5 // pred_check_branch
        %368 = sbr.rel (%p365) target = $region68
      $region67: #{tpu_custom_call.1} parent=5 // pred_region
        %s369 = ssub.s32 %s21, 1
        %p370 = scmp.lt.s32.totalorder %s26, 1
        %s371 = scalar_select %p370, %s26, 1
        %s372 = smul.addr %s371, 8
        %s373 = scalar_lea.vmem %s0, %s372
        %p374 = pneg %p47
        %p375 = pneg %p44
        %p376 = pneg %p68
        %p377 = pneg %p65
        %p378 = pneg %p89
        %p379 = pneg %p86
        %p380 = pneg %p110
        %p381 = pneg %p107
        %p382 = pneg %p131
        %p383 = pneg %p128
        %p384 = pneg %p152
        %p385 = pneg %p149
        %p386 = pneg %p173
        %p387 = pneg %p170
        %p388 = pneg %p194
        %p389 = pneg %p191
        %p390 = pneg %p215
        %p391 = pneg %p212
        %p392 = pneg %p236
        %p393 = pneg %p233
        %p394 = pneg %p257
        %p395 = pneg %p254
        %p396 = pneg %p278
        %p397 = pneg %p275
        %p398 = pneg %p304
        %p399 = pneg %p301
        %s400 = sand.u32 %s291, 1
        %s401 = scalar_lea.sflag [#allocation3], %s400
        %s402 = sand.u32 %s291, 1
        %s403 = smul.addr %s402, 8
        %s404 = scalar_lea.vmem [#allocation2], %s403
        %p405 = scmp.lt.s32.totalorder %s26, 1
        %s406 = scalar_select %p405, %s26, 1
        %s407 = smul.addr %s406, 8
        %s408 = scalar_lea.vmem %s0, %s407
        %v409 = vld [vmem:[%s408] sm:$0xff]
        %v410 = vld [vmem:[%s1] sm:$0x1]
        %v411 = vld [vmem:[%s2] sm:$0x1]
        %vm412 = vcmask 261120
        %v413 = vsel %vm412, %v409, 0.0
        %414 = vadd.xlane.f32.xlu0 %v413
        %v415 = vpop.xlane.xlu0 %414
        %v416 = vrcp.pop 32.0
        %v417 = vmul.f32 %v415, %v416
        %v418 = vsub.f32 %v409, %v417
        %v419 = vmul.f32 %v418, %v418
        %v420 = vsel %vm412, %v419, 0.0
        %421 = vadd.xlane.f32.xlu0 %v420
        %v422 = vpop.xlane.xlu0 %421
        %v423 = vmul.f32 %v422, %v416
        %v424 = vadd.f32 %v423, 1e-05
        %v425 = vrsqrt.pop %v424
        %v426 = vmul.f32 %v418, %v425
        %v428 = vlaneseq
        %v429 = vshrl.u32 %v428, 7
        %v430 = vsub.s32 0, %v429
        %v431 = vrot.slane %v410, %v430
        %v433 = vmul.f32 %v426, %v431
        %v435 = vlaneseq
        %v436 = vshrl.u32 %v435, 7
        %v437 = vsub.s32 0, %v436
        %v438 = vrot.slane %v411, %v437
        %v440 = vadd.f32 %v433, %v438
        %v441 = vld [vmem:[%s3] sm:$0xff]
        %v442 = vld [vmem:[%s3 + $0x8] sm:$0xff]
        %v443 = vld [vmem:[%s3 + $0x10] sm:$0xff]
        %v444 = vld [vmem:[%s3 + $0x18] sm:$0xff]
        %v445 = vld [vmem:[%s3 + $0x20] sm:$0xff]
        %v446 = vld [vmem:[%s3 + $0x28] sm:$0xff]
        %v447 = vld [vmem:[%s3 + $0x30] sm:$0xff]
        %v448 = vld [vmem:[%s3 + $0x38] sm:$0xff]
        %v449 = vld [vmem:[%s3 + $0x40] sm:$0xff]
        %v450 = vld [vmem:[%s3 + $0x48] sm:$0xff]
        %v451 = vld [vmem:[%s3 + $0x50] sm:$0xff]
        %v452 = vld [vmem:[%s3 + $0x58] sm:$0xff]
        %v454 = vsel %vm412, %v440, 0
        %456 = vmatprep.subr.mxu0 %v442
        %457 = vmatpush1.msra.mxu0 %v441
        %458 = vmatprep.subr.mxu0 %v445
        %459 = vmatpush1.msra.mxu0 %v444
        %460 = vmatprep.subr.mxu0 %v448
        %461 = vmatpush1.msra.mxu0 %v447
        %462 = vmatprep.subr.mxu0 %v451
        %463 = vmatpush1.msra.mxu0 %v450
        %464 = vmatprep.subr.mxu0 0.0
        %465 = vmatpush1.msra.mxu0 0.0
        %466 = vmatprep.subr.mxu0 0.0
        %467 = vmatpush1.msra.mxu0 0.0
        %468 = vmatprep.subr.mxu0 0.0
        %469 = vmatpush1.msra.mxu0 0.0
        %470 = vmatprep.subr.mxu0 0.0
        %471 = vmatpush1.msra.mxu0 0.0
        %472 = vmatprep.subr.mxu0 0.0
        %473 = vmatpush1.msra.mxu0 0.0
        %474 = vmatprep.subr.mxu0 0.0
        %475 = vmatpush1.msra.mxu0 0.0
        %476 = vmatprep.subr.mxu0 0.0
        %477 = vmatpush1.msra.mxu0 0.0
        %478 = vmatprep.subr.mxu0 0.0
        %479 = vmatpush1.msra.mxu0 0.0
        %480 = vmatprep.subr.mxu0 0.0
        %481 = vmatpush1.msra.mxu0 0.0
        %482 = vmatprep.subr.mxu0 0.0
        %483 = vmatpush1.msra.mxu0 0.0
        %484 = vmatprep.subr.mxu0 0.0
        %485 = vmatpush1.msra.mxu0 0.0
        %486 = vmatprep.subr.mxu0 0.0
        %487 = vmatpush1.msra.mxu0 0.0
        %488 = vmatprep.subr.mxu0 0.0
        %489 = vmatpush1.msra.mxu0 0.0
        %490 = vmatprep.subr.mxu0 0.0
        %491 = vmatpush1.msra.mxu0 0.0
        %492 = vmatprep.subr.mxu0 0.0
        %493 = vmatpush1.msra.mxu0 0.0
        %494 = vmatprep.subr.mxu0 0.0
        %495 = vmatpush1.msra.mxu0 0.0
        %496 = vmatprep.subr.mxu0 0.0
        %497 = vmatpush1.msra.mxu0 0.0
        %498 = vmatprep.subr.mxu0 0.0
        %499 = vmatpush1.msra.mxu0 0.0
        %500 = vmatprep.subr.mxu0 0.0
        %501 = vmatpush1.msra.mxu0 0.0
        %502 = vmatprep.subr.mxu0 0.0
        %503 = vmatpush1.msra.mxu0 0.0
        %504 = vmatprep.subr.mxu0 0.0
        %505 = vmatpush1.msra.mxu0 0.0
        %506 = vmatprep.subr.mxu0 0.0
        %507 = vmatpush1.msra.mxu0 0.0
        %508 = vmatprep.subr.mxu0 0.0
        %509 = vmatpush1.msra.mxu0 0.0
        %510 = vmatprep.subr.mxu0 0.0
        %511 = vmatpush1.msra.mxu0 0.0
        %512 = vmatprep.subr.mxu0 0.0
        %513 = vmatpush1.msra.mxu0 0.0
        %514 = vmatprep.subr.mxu0 0.0
        %515 = vmatpush1.msra.mxu0 0.0
        %516 = vmatprep.subr.mxu0 0.0
        %517 = vmatpush1.msra.mxu0 0.0
        %518 = vmatprep.subr.mxu0 0.0
        %519 = vmatpush1.msra.mxu0 0.0
        %520 = vmatprep.mubr.f32.mxu0 0.0
        %521 = vmatmul.mubr.f32.gmra.mrb[0].mxu0 %v454
        %v522 = vpop.f32.mrb[0].mxu0
        %v523 = vadd.f32 0.0, %v522
        %v524 = vpop.f32.mrb[0].mxu0
        %v525 = vadd.f32 0.0, %v524
        %526 = vdwg.mxu0
        %527 = vmatprep.subr.mxu0 0.0
        %528 = vmatpush1.msra.mxu0 %v443
        %529 = vmatprep.subr.mxu0 0.0
        %530 = vmatpush1.msra.mxu0 %v446
        %531 = vmatprep.subr.mxu0 0.0
        %532 = vmatpush1.msra.mxu0 %v449
        %533 = vmatprep.subr.mxu0 0.0
        %534 = vmatpush1.msra.mxu0 %v452
        %535 = vmatprep.subr.mxu0 0.0
        %536 = vmatpush1.msra.mxu0 0.0
        %537 = vmatprep.subr.mxu0 0.0
        %538 = vmatpush1.msra.mxu0 0.0
        %539 = vmatprep.subr.mxu0 0.0
        %540 = vmatpush1.msra.mxu0 0.0
        %541 = vmatprep.subr.mxu0 0.0
        %542 = vmatpush1.msra.mxu0 0.0
        %543 = vmatprep.subr.mxu0 0.0
        %544 = vmatpush1.msra.mxu0 0.0
        %545 = vmatprep.subr.mxu0 0.0
        %546 = vmatpush1.msra.mxu0 0.0
        %547 = vmatprep.subr.mxu0 0.0
        %548 = vmatpush1.msra.mxu0 0.0
        %549 = vmatprep.subr.mxu0 0.0
        %550 = vmatpush1.msra.mxu0 0.0
        %551 = vmatprep.subr.mxu0 0.0
        %552 = vmatpush1.msra.mxu0 0.0
        %553 = vmatprep.subr.mxu0 0.0
        %554 = vmatpush1.msra.mxu0 0.0
        %555 = vmatprep.subr.mxu0 0.0
        %556 = vmatpush1.msra.mxu0 0.0
        %557 = vmatprep.subr.mxu0 0.0
        %558 = vmatpush1.msra.mxu0 0.0
        %559 = vmatprep.subr.mxu0 0.0
        %560 = vmatpush1.msra.mxu0 0.0
        %561 = vmatprep.subr.mxu0 0.0
        %562 = vmatpush1.msra.mxu0 0.0
        %563 = vmatprep.subr.mxu0 0.0
        %564 = vmatpush1.msra.mxu0 0.0
        %565 = vmatprep.subr.mxu0 0.0
        %566 = vmatpush1.msra.mxu0 0.0
        %567 = vmatprep.subr.mxu0 0.0
        %568 = vmatpush1.msra.mxu0 0.0
        %569 = vmatprep.subr.mxu0 0.0
        %570 = vmatpush1.msra.mxu0 0.0
        %571 = vmatprep.subr.mxu0 0.0
        %572 = vmatpush1.msra.mxu0 0.0
        %573 = vmatprep.subr.mxu0 0.0
        %574 = vmatpush1.msra.mxu0 0.0
        %575 = vmatprep.subr.mxu0 0.0
        %576 = vmatpush1.msra.mxu0 0.0
        %577 = vmatprep.subr.mxu0 0.0
        %578 = vmatpush1.msra.mxu0 0.0
        %579 = vmatprep.subr.mxu0 0.0
        %580 = vmatpush1.msra.mxu0 0.0
        %581 = vmatprep.subr.mxu0 0.0
        %582 = vmatpush1.msra.mxu0 0.0
        %583 = vmatprep.subr.mxu0 0.0
        %584 = vmatpush1.msra.mxu0 0.0
        %585 = vmatprep.subr.mxu0 0.0
        %586 = vmatpush1.msra.mxu0 0.0
        %587 = vmatprep.subr.mxu0 0.0
        %588 = vmatpush1.msra.mxu0 0.0
        %589 = vmatprep.subr.mxu0 0.0
        %590 = vmatpush1.msra.mxu0 0.0
        %591 = vmatprep.mubr.f32.mxu0 0.0
        %592 = vmatmul.mubr.f32.gmra.mrb[0].mxu0 %v454
        %v593 = vpop.f32.mrb[0].mxu0
        %v594 = vadd.f32 0.0, %v593
        %v595 = vpop.f32.mrb[0].mxu0
        %596 = vdwg.mxu0
        %v597 = vmul.f32 %v523, 0.17677669
        %v599 = vsel %vm412, %v597, 0
        %v602 = vsel %vm412, %v525, 0
        %604 = vmatprep.subr.mxu0 0.0
        %605 = vmatpush1.xpose.msra.mxu0 %v602
        %606 = vmatprep.subr.mxu0 0.0
        %607 = vmatpush1.xpose.msra.mxu0 0.0
        %608 = vmatprep.subr.mxu0 0.0
        %609 = vmatpush1.xpose.msra.mxu0 0.0
        %610 = vmatprep.subr.mxu0 0.0
        %611 = vmatpush1.xpose.msra.mxu0 0.0
        %612 = vmatprep.subr.mxu0 0.0
        %613 = vmatpush1.xpose.msra.mxu0 0.0
        %614 = vmatprep.subr.mxu0 0.0
        %615 = vmatpush1.xpose.msra.mxu0 0.0
        %616 = vmatprep.subr.mxu0 0.0
        %617 = vmatpush1.xpose.msra.mxu0 0.0
        %618 = vmatprep.subr.mxu0 0.0
        %619 = vmatpush1.xpose.msra.mxu0 0.0
        %620 = vmatprep.subr.mxu0 0.0
        %621 = vmatpush1.xpose.msra.mxu0 0.0
        %622 = vmatprep.subr.mxu0 0.0
        %623 = vmatpush1.xpose.msra.mxu0 0.0
        %624 = vmatprep.subr.mxu0 0.0
        %625 = vmatpush1.xpose.msra.mxu0 0.0
        %626 = vmatprep.subr.mxu0 0.0
        %627 = vmatpush1.xpose.msra.mxu0 0.0
        %628 = vmatprep.subr.mxu0 0.0
        %629 = vmatpush1.xpose.msra.mxu0 0.0
        %630 = vmatprep.subr.mxu0 0.0
        %631 = vmatpush1.xpose.msra.mxu0 0.0
        %632 = vmatprep.subr.mxu0 0.0
        %633 = vmatpush1.xpose.msra.mxu0 0.0
        %634 = vmatprep.subr.mxu0 0.0
        %635 = vmatpush1.xpose.msra.mxu0 0.0
        %636 = vmatprep.subr.mxu0 0.0
        %637 = vmatpush1.xpose.msra.mxu0 0.0
        %638 = vmatprep.subr.mxu0 0.0
        %639 = vmatpush1.xpose.msra.mxu0 0.0
        %640 = vmatprep.subr.mxu0 0.0
        %641 = vmatpush1.xpose.msra.mxu0 0.0
        %642 = vmatprep.subr.mxu0 0.0
        %643 = vmatpush1.xpose.msra.mxu0 0.0
        %644 = vmatprep.subr.mxu0 0.0
        %645 = vmatpush1.xpose.msra.mxu0 0.0
        %646 = vmatprep.subr.mxu0 0.0
        %647 = vmatpush1.xpose.msra.mxu0 0.0
        %648 = vmatprep.subr.mxu0 0.0
        %649 = vmatpush1.xpose.msra.mxu0 0.0
        %650 = vmatprep.subr.mxu0 0.0
        %651 = vmatpush1.xpose.msra.mxu0 0.0
        %652 = vmatprep.subr.mxu0 0.0
        %653 = vmatpush1.xpose.msra.mxu0 0.0
        %654 = vmatprep.subr.mxu0 0.0
        %655 = vmatpush1.xpose.msra.mxu0 0.0
        %656 = vmatprep.subr.mxu0 0.0
        %657 = vmatpush1.xpose.msra.mxu0 0.0
        %658 = vmatprep.subr.mxu0 0.0
        %659 = vmatpush1.xpose.msra.mxu0 0.0
        %660 = vmatprep.subr.mxu0 0.0
        %661 = vmatpush1.xpose.msra.mxu0 0.0
        %662 = vmatprep.subr.mxu0 0.0
        %663 = vmatpush1.xpose.msra.mxu0 0.0
        %664 = vmatprep.subr.mxu0 0.0
        %665 = vmatpush1.xpose.msra.mxu0 0.0
        %666 = vmatprep.subr.mxu0 0.0
        %667 = vmatpush1.xpose.msra.mxu0 0.0
        %668 = vmatprep.mubr.f32.mxu0 0.0
        %669 = vmatmul.mubr.f32.gmra.mrb[0].mxu0 %v599
        %v670 = vpop.f32.mrb[0].mxu0
        %v671 = vadd.f32 0.0, %v670
        %v672 = vpop.f32.mrb[0].mxu0
        %673 = vdwg.mxu0
        %vm674 = vcmask 64512
        %v675 = vsel %vm674, %v671, -inf
        %676 = vmax.xlane.f32.xlu0 %v675
        %v677 = vpop.xlane.xlu0 %676
        %v678 = vsub.f32 %v671, %v677
        %v679 = vmul.f32 %v678, 1.442695
        %v680 = vpow.pop %v679
        %v681 = vsel %vm674, %v680, 0.0
        %682 = vadd.xlane.f32.xlu0 %v681
        %v683 = vpop.xlane.xlu0 %682
        %v684 = vrcp.pop %v683
        %v685 = vmul.f32 %v680, %v684
        %v687 = vsel %vm674, %v685, 0
        %689 = vmatprep.subr.mxu0 0.0
        %690 = vmatpush1.msra.mxu0 %v594
        %691 = vmatprep.subr.mxu0 0.0
        %692 = vmatpush1.msra.mxu0 0.0
        %693 = vmatprep.subr.mxu0 0.0
        %694 = vmatpush1.msra.mxu0 0.0
        %695 = vmatprep.subr.mxu0 0.0
        %696 = vmatpush1.msra.mxu0 0.0
        %697 = vmatprep.subr.mxu0 0.0
        %698 = vmatpush1.msra.mxu0 0.0
        %699 = vmatprep.subr.mxu0 0.0
        %700 = vmatpush1.msra.mxu0 0.0
        %701 = vmatprep.subr.mxu0 0.0
        %702 = vmatpush1.msra.mxu0 0.0
        %703 = vmatprep.subr.mxu0 0.0
        %704 = vmatpush1.msra.mxu0 0.0
        %705 = vmatprep.subr.mxu0 0.0
        %706 = vmatpush1.msra.mxu0 0.0
        %707 = vmatprep.subr.mxu0 0.0
        %708 = vmatpush1.msra.mxu0 0.0
        %709 = vmatprep.subr.mxu0 0.0
        %710 = vmatpush1.msra.mxu0 0.0
        %711 = vmatprep.subr.mxu0 0.0
        %712 = vmatpush1.msra.mxu0 0.0
        %713 = vmatprep.subr.mxu0 0.0
        %714 = vmatpush1.msra.mxu0 0.0
        %715 = vmatprep.subr.mxu0 0.0
        %716 = vmatpush1.msra.mxu0 0.0
        %717 = vmatprep.subr.mxu0 0.0
        %718 = vmatpush1.msra.mxu0 0.0
        %719 = vmatprep.subr.mxu0 0.0
        %720 = vmatpush1.msra.mxu0 0.0
        %721 = vmatprep.subr.mxu0 0.0
        %722 = vmatpush1.msra.mxu0 0.0
        %723 = vmatprep.subr.mxu0 0.0
        %724 = vmatpush1.msra.mxu0 0.0
        %725 = vmatprep.subr.mxu0 0.0
        %726 = vmatpush1.msra.mxu0 0.0
        %727 = vmatprep.subr.mxu0 0.0
        %728 = vmatpush1.msra.mxu0 0.0
        %729 = vmatprep.subr.mxu0 0.0
        %730 = vmatpush1.msra.mxu0 0.0
        %731 = vmatprep.subr.mxu0 0.0
        %732 = vmatpush1.msra.mxu0 0.0
        %733 = vmatprep.subr.mxu0 0.0
        %734 = vmatpush1.msra.mxu0 0.0
        %735 = vmatprep.subr.mxu0 0.0
        %736 = vmatpush1.msra.mxu0 0.0
        %737 = vmatprep.subr.mxu0 0.0
        %738 = vmatpush1.msra.mxu0 0.0
        %739 = vmatprep.subr.mxu0 0.0
        %740 = vmatpush1.msra.mxu0 0.0
        %741 = vmatprep.subr.mxu0 0.0
        %742 = vmatpush1.msra.mxu0 0.0
        %743 = vmatprep.subr.mxu0 0.0
        %744 = vmatpush1.msra.mxu0 0.0
        %745 = vmatprep.subr.mxu0 0.0
        %746 = vmatpush1.msra.mxu0 0.0
        %747 = vmatprep.subr.mxu0 0.0
        %748 = vmatpush1.msra.mxu0 0.0
        %749 = vmatprep.subr.mxu0 0.0
        %750 = vmatpush1.msra.mxu0 0.0
        %751 = vmatprep.subr.mxu0 0.0
        %752 = vmatpush1.msra.mxu0 0.0
        %753 = vmatprep.mubr.f32.mxu0 0.0
        %754 = vmatmul.mubr.f32.gmra.mrb[0].mxu0 %v687
        %v755 = vpop.f32.mrb[0].mxu0
        %v756 = vadd.f32 0.0, %v755
        %v757 = vpop.f32.mrb[0].mxu0
        %758 = vdwg.mxu0
        %759 = vrot.lane.b32.xlu0 %v597, 96
        %v760 = vpop.permute.xlu0 %759
        %761 = vrot.lane.b32.xlu0 %v525, 96
        %v762 = vpop.permute.xlu0 %761
        %v763 = vsel %vm412, %v760, 0
        %v765 = vsel %vm412, %v762, 0
        %767 = vmatprep.subr.mxu0 0.0
        %768 = vmatpush1.xpose.msra.mxu0 %v765
        %769 = vmatprep.subr.mxu0 0.0
        %770 = vmatpush1.xpose.msra.mxu0 0.0
        %771 = vmatprep.subr.mxu0 0.0
        %772 = vmatpush1.xpose.msra.mxu0 0.0
        %773 = vmatprep.subr.mxu0 0.0
        %774 = vmatpush1.xpose.msra.mxu0 0.0
        %775 = vmatprep.subr.mxu0 0.0
        %776 = vmatpush1.xpose.msra.mxu0 0.0
        %777 = vmatprep.subr.mxu0 0.0
        %778 = vmatpush1.xpose.msra.mxu0 0.0
        %779 = vmatprep.subr.mxu0 0.0
        %780 = vmatpush1.xpose.msra.mxu0 0.0
        %781 = vmatprep.subr.mxu0 0.0
        %782 = vmatpush1.xpose.msra.mxu0 0.0
        %783 = vmatprep.subr.mxu0 0.0
        %784 = vmatpush1.xpose.msra.mxu0 0.0
        %785 = vmatprep.subr.mxu0 0.0
        %786 = vmatpush1.xpose.msra.mxu0 0.0
        %787 = vmatprep.subr.mxu0 0.0
        %788 = vmatpush1.xpose.msra.mxu0 0.0
        %789 = vmatprep.subr.mxu0 0.0
        %790 = vmatpush1.xpose.msra.mxu0 0.0
        %791 = vmatprep.subr.mxu0 0.0
        %792 = vmatpush1.xpose.msra.mxu0 0.0
        %793 = vmatprep.subr.mxu0 0.0
        %794 = vmatpush1.xpose.msra.mxu0 0.0
        %795 = vmatprep.subr.mxu0 0.0
        %796 = vmatpush1.xpose.msra.mxu0 0.0
        %797 = vmatprep.subr.mxu0 0.0
        %798 = vmatpush1.xpose.msra.mxu0 0.0
        %799 = vmatprep.subr.mxu0 0.0
        %800 = vmatpush1.xpose.msra.mxu0 0.0
        %801 = vmatprep.subr.mxu0 0.0
        %802 = vmatpush1.xpose.msra.mxu0 0.0
        %803 = vmatprep.subr.mxu0 0.0
        %804 = vmatpush1.xpose.msra.mxu0 0.0
        %805 = vmatprep.subr.mxu0 0.0
        %806 = vmatpush1.xpose.msra.mxu0 0.0
        %807 = vmatprep.subr.mxu0 0.0
        %808 = vmatpush1.xpose.msra.mxu0 0.0
        %809 = vmatprep.subr.mxu0 0.0
        %810 = vmatpush1.xpose.msra.mxu0 0.0
        %811 = vmatprep.subr.mxu0 0.0
        %812 = vmatpush1.xpose.msra.mxu0 0.0
        %813 = vmatprep.subr.mxu0 0.0
        %814 = vmatpush1.xpose.msra.mxu0 0.0
        %815 = vmatprep.subr.mxu0 0.0
        %816 = vmatpush1.xpose.msra.mxu0 0.0
        %817 = vmatprep.subr.mxu0 0.0
        %818 = vmatpush1.xpose.msra.mxu0 0.0
        %819 = vmatprep.subr.mxu0 0.0
        %820 = vmatpush1.xpose.msra.mxu0 0.0
        %821 = vmatprep.subr.mxu0 0.0
        %822 = vmatpush1.xpose.msra.mxu0 0.0
        %823 = vmatprep.subr.mxu0 0.0
        %824 = vmatpush1.xpose.msra.mxu0 0.0
        %825 = vmatprep.subr.mxu0 0.0
        %826 = vmatpush1.xpose.msra.mxu0 0.0
        %827 = vmatprep.subr.mxu0 0.0
        %828 = vmatpush1.xpose.msra.mxu0 0.0
        %829 = vmatprep.subr.mxu0 0.0
        %830 = vmatpush1.xpose.msra.mxu0 0.0
        %831 = vmatprep.mubr.f32.mxu0 0.0
        %832 = vmatmul.mubr.f32.gmra.mrb[0].mxu0 %v763
        %v833 = vpop.f32.mrb[0].mxu0
        %v834 = vadd.f32 0.0, %v833
        %v835 = vpop.f32.mrb[0].mxu0
        %836 = vdwg.mxu0
        %v837 = vsel %vm674, %v834, -inf
        %838 = vmax.xlane.f32.xlu0 %v837
        %v839 = vpop.xlane.xlu0 %838
        %v840 = vsub.f32 %v834, %v839
        %v841 = vmul.f32 %v840, 1.442695
        %v842 = vpow.pop %v841
        %v843 = vsel %vm674, %v842, 0.0
        %844 = vadd.xlane.f32.xlu0 %v843
        %v845 = vpop.xlane.xlu0 %844
        %v846 = vrcp.pop %v845
        %v847 = vmul.f32 %v842, %v846
        %849 = vrot.lane.b32.xlu0 %v594, 96
        %v850 = vpop.permute.xlu0 %849
        %v853 = vsel %vm674, %v847, 0
        %855 = vmatprep.subr.mxu0 0.0
        %856 = vmatpush1.msra.mxu0 %v850
        %857 = vmatprep.subr.mxu0 0.0
        %858 = vmatpush1.msra.mxu0 0.0
        %859 = vmatprep.subr.mxu0 0.0
        %860 = vmatpush1.msra.mxu0 0.0
        %861 = vmatprep.subr.mxu0 0.0
        %862 = vmatpush1.msra.mxu0 0.0
        %863 = vmatprep.subr.mxu0 0.0
        %864 = vmatpush1.msra.mxu0 0.0
        %865 = vmatprep.subr.mxu0 0.0
        %866 = vmatpush1.msra.mxu0 0.0
        %867 = vmatprep.subr.mxu0 0.0
        %868 = vmatpush1.msra.mxu0 0.0
        %869 = vmatprep.subr.mxu0 0.0
        %870 = vmatpush1.msra.mxu0 0.0
        %871 = vmatprep.subr.mxu0 0.0
        %872 = vmatpush1.msra.mxu0 0.0
        %873 = vmatprep.subr.mxu0 0.0
        %874 = vmatpush1.msra.mxu0 0.0
        %875 = vmatprep.subr.mxu0 0.0
        %876 = vmatpush1.msra.mxu0 0.0
        %877 = vmatprep.subr.mxu0 0.0
        %878 = vmatpush1.msra.mxu0 0.0
        %879 = vmatprep.subr.mxu0 0.0
        %880 = vmatpush1.msra.mxu0 0.0
        %881 = vmatprep.subr.mxu0 0.0
        %882 = vmatpush1.msra.mxu0 0.0
        %883 = vmatprep.subr.mxu0 0.0
        %884 = vmatpush1.msra.mxu0 0.0
        %885 = vmatprep.subr.mxu0 0.0
        %886 = vmatpush1.msra.mxu0 0.0
        %887 = vmatprep.subr.mxu0 0.0
        %888 = vmatpush1.msra.mxu0 0.0
        %889 = vmatprep.subr.mxu0 0.0
        %890 = vmatpush1.msra.mxu0 0.0
        %891 = vmatprep.subr.mxu0 0.0
        %892 = vmatpush1.msra.mxu0 0.0
        %893 = vmatprep.subr.mxu0 0.0
        %894 = vmatpush1.msra.mxu0 0.0
        %895 = vmatprep.subr.mxu0 0.0
        %896 = vmatpush1.msra.mxu0 0.0
        %897 = vmatprep.subr.mxu0 0.0
        %898 = vmatpush1.msra.mxu0 0.0
        %899 = vmatprep.subr.mxu0 0.0
        %900 = vmatpush1.msra.mxu0 0.0
        %901 = vmatprep.subr.mxu0 0.0
        %902 = vmatpush1.msra.mxu0 0.0
        %903 = vmatprep.subr.mxu0 0.0
        %904 = vmatpush1.msra.mxu0 0.0
        %905 = vmatprep.subr.mxu0 0.0
        %906 = vmatpush1.msra.mxu0 0.0
        %907 = vmatprep.subr.mxu0 0.0
        %908 = vmatpush1.msra.mxu0 0.0
        %909 = vmatprep.subr.mxu0 0.0
        %910 = vmatpush1.msra.mxu0 0.0
        %911 = vmatprep.subr.mxu0 0.0
        %912 = vmatpush1.msra.mxu0 0.0
        %913 = vmatprep.subr.mxu0 0.0
        %914 = vmatpush1.msra.mxu0 0.0
        %915 = vmatprep.subr.mxu0 0.0
        %916 = vmatpush1.msra.mxu0 0.0
        %917 = vmatprep.subr.mxu0 0.0
        %918 = vmatpush1.msra.mxu0 0.0
        %919 = vmatprep.mubr.f32.mxu0 0.0
        %920 = vmatmul.mubr.f32.gmra.mrb[0].mxu0 %v853
        %v921 = vpop.f32.mrb[0].mxu0
        %v922 = vadd.f32 0.0, %v921
        %v923 = vpop.f32.mrb[0].mxu0
        %924 = vdwg.mxu0
        %925 = vrot.lane.b32.xlu0 %v597, 64
        %v926 = vpop.permute.xlu0 %925
        %927 = vrot.lane.b32.xlu0 %v525, 64
        %v928 = vpop.permute.xlu0 %927
        %v929 = vsel %vm412, %v926, 0
        %v931 = vsel %vm412, %v928, 0
        %933 = vmatprep.subr.mxu0 0.0
        %934 = vmatpush1.xpose.msra.mxu0 %v931
        %935 = vmatprep.subr.mxu0 0.0
        %936 = vmatpush1.xpose.msra.mxu0 0.0
        %937 = vmatprep.subr.mxu0 0.0
        %938 = vmatpush1.xpose.msra.mxu0 0.0
        %939 = vmatprep.subr.mxu0 0.0
        %940 = vmatpush1.xpose.msra.mxu0 0.0
        %941 = vmatprep.subr.mxu0 0.0
        %942 = vmatpush1.xpose.msra.mxu0 0.0
        %943 = vmatprep.subr.mxu0 0.0
        %944 = vmatpush1.xpose.msra.mxu0 0.0
        %945 = vmatprep.subr.mxu0 0.0
        %946 = vmatpush1.xpose.msra.mxu0 0.0
        %947 = vmatprep.subr.mxu0 0.0
        %948 = vmatpush1.xpose.msra.mxu0 0.0
        %949 = vmatprep.subr.mxu0 0.0
        %950 = vmatpush1.xpose.msra.mxu0 0.0
        %951 = vmatprep.subr.mxu0 0.0
        %952 = vmatpush1.xpose.msra.mxu0 0.0
        %953 = vmatprep.subr.mxu0 0.0
        %954 = vmatpush1.xpose.msra.mxu0 0.0
        %955 = vmatprep.subr.mxu0 0.0
        %956 = vmatpush1.xpose.msra.mxu0 0.0
        %957 = vmatprep.subr.mxu0 0.0
        %958 = vmatpush1.xpose.msra.mxu0 0.0
        %959 = vmatprep.subr.mxu0 0.0
        %960 = vmatpush1.xpose.msra.mxu0 0.0
        %961 = vmatprep.subr.mxu0 0.0
        %962 = vmatpush1.xpose.msra.mxu0 0.0
        %963 = vmatprep.subr.mxu0 0.0
        %964 = vmatpush1.xpose.msra.mxu0 0.0
        %965 = vmatprep.subr.mxu0 0.0
        %966 = vmatpush1.xpose.msra.mxu0 0.0
        %967 = vmatprep.subr.mxu0 0.0
        %968 = vmatpush1.xpose.msra.mxu0 0.0
        %969 = vmatprep.subr.mxu0 0.0
        %970 = vmatpush1.xpose.msra.mxu0 0.0
        %971 = vmatprep.subr.mxu0 0.0
        %972 = vmatpush1.xpose.msra.mxu0 0.0
        %973 = vmatprep.subr.mxu0 0.0
        %974 = vmatpush1.xpose.msra.mxu0 0.0
        %975 = vmatprep.subr.mxu0 0.0
        %976 = vmatpush1.xpose.msra.mxu0 0.0
        %977 = vmatprep.subr.mxu0 0.0
        %978 = vmatpush1.xpose.msra.mxu0 0.0
        %979 = vmatprep.subr.mxu0 0.0
        %980 = vmatpush1.xpose.msra.mxu0 0.0
        %981 = vmatprep.subr.mxu0 0.0
        %982 = vmatpush1.xpose.msra.mxu0 0.0
        %983 = vmatprep.subr.mxu0 0.0
        %984 = vmatpush1.xpose.msra.mxu0 0.0
        %985 = vmatprep.subr.mxu0 0.0
        %986 = vmatpush1.xpose.msra.mxu0 0.0
        %987 = vmatprep.subr.mxu0 0.0
        %988 = vmatpush1.xpose.msra.mxu0 0.0
        %989 = vmatprep.subr.mxu0 0.0
        %990 = vmatpush1.xpose.msra.mxu0 0.0
        %991 = vmatprep.subr.mxu0 0.0
        %992 = vmatpush1.xpose.msra.mxu0 0.0
        %993 = vmatprep.subr.mxu0 0.0
        %994 = vmatpush1.xpose.msra.mxu0 0.0
        %995 = vmatprep.subr.mxu0 0.0
        %996 = vmatpush1.xpose.msra.mxu0 0.0
        %997 = vmatprep.mubr.f32.mxu0 0.0
        %998 = vmatmul.mubr.f32.gmra.mrb[0].mxu0 %v929
        %v999 = vpop.f32.mrb[0].mxu0
        %v1000 = vadd.f32 0.0, %v999
        %v1001 = vpop.f32.mrb[0].mxu0
        %1002 = vdwg.mxu0
        %v1003 = vsel %vm674, %v1000, -inf
        %1004 = vmax.xlane.f32.xlu0 %v1003
        %v1005 = vpop.xlane.xlu0 %1004
        %v1006 = vsub.f32 %v1000, %v1005
        %v1007 = vmul.f32 %v1006, 1.442695
        %v1008 = vpow.pop %v1007
        %v1009 = vsel %vm674, %v1008, 0.0
        %1010 = vadd.xlane.f32.xlu0 %v1009
        %v1011 = vpop.xlane.xlu0 %1010
        %v1012 = vrcp.pop %v1011
        %v1013 = vmul.f32 %v1008, %v1012
        %1014 = vrot.lane.b32.xlu0 %v594, 64
        %v1015 = vpop.permute.xlu0 %1014
        %v1018 = vsel %vm674, %v1013, 0
        %1020 = vmatprep.subr.mxu0 0.0
        %1021 = vmatpush1.msra.mxu0 %v1015
        %1022 = vmatprep.subr.mxu0 0.0
        %1023 = vmatpush1.msra.mxu0 0.0
        %1024 = vmatprep.subr.mxu0 0.0
        %1025 = vmatpush1.msra.mxu0 0.0
        %1026 = vmatprep.subr.mxu0 0.0
        %1027 = vmatpush1.msra.mxu0 0.0
        %1028 = vmatprep.subr.mxu0 0.0
        %1029 = vmatpush1.msra.mxu0 0.0
        %1030 = vmatprep.subr.mxu0 0.0
        %1031 = vmatpush1.msra.mxu0 0.0
        %1032 = vmatprep.subr.mxu0 0.0
        %1033 = vmatpush1.msra.mxu0 0.0
        %1034 = vmatprep.subr.mxu0 0.0
        %1035 = vmatpush1.msra.mxu0 0.0
        %1036 = vmatprep.subr.mxu0 0.0
        %1037 = vmatpush1.msra.mxu0 0.0
        %1038 = vmatprep.subr.mxu0 0.0
        %1039 = vmatpush1.msra.mxu0 0.0
        %1040 = vmatprep.subr.mxu0 0.0
        %1041 = vmatpush1.msra.mxu0 0.0
        %1042 = vmatprep.subr.mxu0 0.0
        %1043 = vmatpush1.msra.mxu0 0.0
        %1044 = vmatprep.subr.mxu0 0.0
        %1045 = vmatpush1.msra.mxu0 0.0
        %1046 = vmatprep.subr.mxu0 0.0
        %1047 = vmatpush1.msra.mxu0 0.0
        %1048 = vmatprep.subr.mxu0 0.0
        %1049 = vmatpush1.msra.mxu0 0.0
        %1050 = vmatprep.subr.mxu0 0.0
        %1051 = vmatpush1.msra.mxu0 0.0
        %1052 = vmatprep.subr.mxu0 0.0
        %1053 = vmatpush1.msra.mxu0 0.0
        %1054 = vmatprep.subr.mxu0 0.0
        %1055 = vmatpush1.msra.mxu0 0.0
        %1056 = vmatprep.subr.mxu0 0.0
        %1057 = vmatpush1.msra.mxu0 0.0
        %1058 = vmatprep.subr.mxu0 0.0
        %1059 = vmatpush1.msra.mxu0 0.0
        %1060 = vmatprep.subr.mxu0 0.0
        %1061 = vmatpush1.msra.mxu0 0.0
        %1062 = vmatprep.subr.mxu0 0.0
        %1063 = vmatpush1.msra.mxu0 0.0
        %1064 = vmatprep.subr.mxu0 0.0
        %1065 = vmatpush1.msra.mxu0 0.0
        %1066 = vmatprep.subr.mxu0 0.0
        %1067 = vmatpush1.msra.mxu0 0.0
        %1068 = vmatprep.subr.mxu0 0.0
        %1069 = vmatpush1.msra.mxu0 0.0
        %1070 = vmatprep.subr.mxu0 0.0
        %1071 = vmatpush1.msra.mxu0 0.0
        %1072 = vmatprep.subr.mxu0 0.0
        %1073 = vmatpush1.msra.mxu0 0.0
        %1074 = vmatprep.subr.mxu0 0.0
        %1075 = vmatpush1.msra.mxu0 0.0
        %1076 = vmatprep.subr.mxu0 0.0
        %1077 = vmatpush1.msra.mxu0 0.0
        %1078 = vmatprep.subr.mxu0 0.0
        %1079 = vmatpush1.msra.mxu0 0.0
        %1080 = vmatprep.subr.mxu0 0.0
        %1081 = vmatpush1.msra.mxu0 0.0
        %1082 = vmatprep.subr.mxu0 0.0
        %1083 = vmatpush1.msra.mxu0 0.0
        %1084 = vmatprep.mubr.f32.mxu0 0.0
        %1085 = vmatmul.mubr.f32.gmra.mrb[0].mxu0 %v1018
        %v1086 = vpop.f32.mrb[0].mxu0
        %v1087 = vadd.f32 0.0, %v1086
        %v1088 = vpop.f32.mrb[0].mxu0
        %1089 = vdwg.mxu0
        %1090 = vrot.lane.b32.xlu0 %v597, 32
        %v1091 = vpop.permute.xlu0 %1090
        %1092 = vrot.lane.b32.xlu0 %v525, 32
        %v1093 = vpop.permute.xlu0 %1092
        %v1094 = vsel %vm412, %v1091, 0
        %v1096 = vsel %vm412, %v1093, 0
        %1098 = vmatprep.subr.mxu0 0.0
        %1099 = vmatpush1.xpose.msra.mxu0 %v1096
        %1100 = vmatprep.subr.mxu0 0.0
        %1101 = vmatpush1.xpose.msra.mxu0 0.0
        %1102 = vmatprep.subr.mxu0 0.0
        %1103 = vmatpush1.xpose.msra.mxu0 0.0
        %1104 = vmatprep.subr.mxu0 0.0
        %1105 = vmatpush1.xpose.msra.mxu0 0.0
        %1106 = vmatprep.subr.mxu0 0.0
        %1107 = vmatpush1.xpose.msra.mxu0 0.0
        %1108 = vmatprep.subr.mxu0 0.0
        %1109 = vmatpush1.xpose.msra.mxu0 0.0
        %1110 = vmatprep.subr.mxu0 0.0
        %1111 = vmatpush1.xpose.msra.mxu0 0.0
        %1112 = vmatprep.subr.mxu0 0.0
        %1113 = vmatpush1.xpose.msra.mxu0 0.0
        %1114 = vmatprep.subr.mxu0 0.0
        %1115 = vmatpush1.xpose.msra.mxu0 0.0
        %1116 = vmatprep.subr.mxu0 0.0
        %1117 = vmatpush1.xpose.msra.mxu0 0.0
        %1118 = vmatprep.subr.mxu0 0.0
        %1119 = vmatpush1.xpose.msra.mxu0 0.0
        %1120 = vmatprep.subr.mxu0 0.0
        %1121 = vmatpush1.xpose.msra.mxu0 0.0
        %1122 = vmatprep.subr.mxu0 0.0
        %1123 = vmatpush1.xpose.msra.mxu0 0.0
        %1124 = vmatprep.subr.mxu0 0.0
        %1125 = vmatpush1.xpose.msra.mxu0 0.0
        %1126 = vmatprep.subr.mxu0 0.0
        %1127 = vmatpush1.xpose.msra.mxu0 0.0
        %1128 = vmatprep.subr.mxu0 0.0
        %1129 = vmatpush1.xpose.msra.mxu0 0.0
        %1130 = vmatprep.subr.mxu0 0.0
        %1131 = vmatpush1.xpose.msra.mxu0 0.0
        %1132 = vmatprep.subr.mxu0 0.0
        %1133 = vmatpush1.xpose.msra.mxu0 0.0
        %1134 = vmatprep.subr.mxu0 0.0
        %1135 = vmatpush1.xpose.msra.mxu0 0.0
        %1136 = vmatprep.subr.mxu0 0.0
        %1137 = vmatpush1.xpose.msra.mxu0 0.0
        %1138 = vmatprep.subr.mxu0 0.0
        %1139 = vmatpush1.xpose.msra.mxu0 0.0
        %1140 = vmatprep.subr.mxu0 0.0
        %1141 = vmatpush1.xpose.msra.mxu0 0.0
        %1142 = vmatprep.subr.mxu0 0.0
        %1143 = vmatpush1.xpose.msra.mxu0 0.0
        %1144 = vmatprep.subr.mxu0 0.0
        %1145 = vmatpush1.xpose.msra.mxu0 0.0
        %1146 = vmatprep.subr.mxu0 0.0
        %1147 = vmatpush1.xpose.msra.mxu0 0.0
        %1148 = vmatprep.subr.mxu0 0.0
        %1149 = vmatpush1.xpose.msra.mxu0 0.0
        %1150 = vmatprep.subr.mxu0 0.0
        %1151 = vmatpush1.xpose.msra.mxu0 0.0
        %1152 = vmatprep.subr.mxu0 0.0
        %1153 = vmatpush1.xpose.msra.mxu0 0.0
        %1154 = vmatprep.subr.mxu0 0.0
        %1155 = vmatpush1.xpose.msra.mxu0 0.0
        %1156 = vmatprep.subr.mxu0 0.0
        %1157 = vmatpush1.xpose.msra.mxu0 0.0
        %1158 = vmatprep.subr.mxu0 0.0
        %1159 = vmatpush1.xpose.msra.mxu0 0.0
        %1160 = vmatprep.subr.mxu0 0.0
        %1161 = vmatpush1.xpose.msra.mxu0 0.0
        %1162 = vmatprep.mubr.f32.mxu0 0.0
        %1163 = vmatmul.mubr.f32.gmra.mrb[0].mxu0 %v1094
        %v1164 = vpop.f32.mrb[0].mxu0
        %v1165 = vadd.f32 0.0, %v1164
        %v1166 = vpop.f32.mrb[0].mxu0
        %1167 = vdwg.mxu0
        %v1168 = vsel %vm674, %v1165, -inf
        %1169 = vmax.xlane.f32.xlu0 %v1168
        %v1170 = vpop.xlane.xlu0 %1169
        %v1171 = vsub.f32 %v1165, %v1170
        %v1172 = vmul.f32 %v1171, 1.442695
        %v1173 = vpow.pop %v1172
        %v1174 = vsel %vm674, %v1173, 0.0
        %1175 = vadd.xlane.f32.xlu0 %v1174
        %v1176 = vpop.xlane.xlu0 %1175
        %v1177 = vrcp.pop %v1176
        %v1178 = vmul.f32 %v1173, %v1177
        %1179 = vrot.lane.b32.xlu0 %v594, 32
        %v1180 = vpop.permute.xlu0 %1179
        %v1183 = vsel %vm674, %v1178, 0
        %1185 = vmatprep.subr.mxu0 0.0
        %1186 = vmatpush1.msra.mxu0 %v1180
        %1187 = vmatprep.subr.mxu0 0.0
        %1188 = vmatpush1.msra.mxu0 0.0
        %1189 = vmatprep.subr.mxu0 0.0
        %1190 = vmatpush1.msra.mxu0 0.0
        %1191 = vmatprep.subr.mxu0 0.0
        %1192 = vmatpush1.msra.mxu0 0.0
        %1193 = vmatprep.subr.mxu0 0.0
        %1194 = vmatpush1.msra.mxu0 0.0
        %1195 = vmatprep.subr.mxu0 0.0
        %1196 = vmatpush1.msra.mxu0 0.0
        %1197 = vmatprep.subr.mxu0 0.0
        %1198 = vmatpush1.msra.mxu0 0.0
        %1199 = vmatprep.subr.mxu0 0.0
        %1200 = vmatpush1.msra.mxu0 0.0
        %1201 = vmatprep.subr.mxu0 0.0
        %1202 = vmatpush1.msra.mxu0 0.0
        %1203 = vmatprep.subr.mxu0 0.0
        %1204 = vmatpush1.msra.mxu0 0.0
        %1205 = vmatprep.subr.mxu0 0.0
        %1206 = vmatpush1.msra.mxu0 0.0
        %1207 = vmatprep.subr.mxu0 0.0
        %1208 = vmatpush1.msra.mxu0 0.0
        %1209 = vmatprep.subr.mxu0 0.0
        %1210 = vmatpush1.msra.mxu0 0.0
        %1211 = vmatprep.subr.mxu0 0.0
        %1212 = vmatpush1.msra.mxu0 0.0
        %1213 = vmatprep.subr.mxu0 0.0
        %1214 = vmatpush1.msra.mxu0 0.0
        %1215 = vmatprep.subr.mxu0 0.0
        %1216 = vmatpush1.msra.mxu0 0.0
        %1217 = vmatprep.subr.mxu0 0.0
        %1218 = vmatpush1.msra.mxu0 0.0
        %1219 = vmatprep.subr.mxu0 0.0
        %1220 = vmatpush1.msra.mxu0 0.0
        %1221 = vmatprep.subr.mxu0 0.0
        %1222 = vmatpush1.msra.mxu0 0.0
        %1223 = vmatprep.subr.mxu0 0.0
        %1224 = vmatpush1.msra.mxu0 0.0
        %1225 = vmatprep.subr.mxu0 0.0
        %1226 = vmatpush1.msra.mxu0 0.0
        %1227 = vmatprep.subr.mxu0 0.0
        %1228 = vmatpush1.msra.mxu0 0.0
        %1229 = vmatprep.subr.mxu0 0.0
        %1230 = vmatpush1.msra.mxu0 0.0
        %1231 = vmatprep.subr.mxu0 0.0
        %1232 = vmatpush1.msra.mxu0 0.0
        %1233 = vmatprep.subr.mxu0 0.0
        %1234 = vmatpush1.msra.mxu0 0.0
        %1235 = vmatprep.subr.mxu0 0.0
        %1236 = vmatpush1.msra.mxu0 0.0
        %1237 = vmatprep.subr.mxu0 0.0
        %1238 = vmatpush1.msra.mxu0 0.0
        %1239 = vmatprep.subr.mxu0 0.0
        %1240 = vmatpush1.msra.mxu0 0.0
        %1241 = vmatprep.subr.mxu0 0.0
        %1242 = vmatpush1.msra.mxu0 0.0
        %1243 = vmatprep.subr.mxu0 0.0
        %1244 = vmatpush1.msra.mxu0 0.0
        %1245 = vmatprep.subr.mxu0 0.0
        %1246 = vmatpush1.msra.mxu0 0.0
        %1247 = vmatprep.subr.mxu0 0.0
        %1248 = vmatpush1.msra.mxu0 0.0
        %1249 = vmatprep.mubr.f32.mxu0 0.0
        %1250 = vmatmul.mubr.f32.gmra.mrb[0].mxu0 %v1183
        %v1251 = vpop.f32.mrb[0].mxu0
        %v1252 = vadd.f32 0.0, %v1251
        %v1253 = vpop.f32.mrb[0].mxu0
        %1254 = vdwg.mxu0
        %1256 = vrot.lane.b32.xlu0 %v922, 32
        %v1257 = vpop.permute.xlu0 %1256
        %1260 = vrot.lane.b32.xlu0 %v1087, 64
        %v1261 = vpop.permute.xlu0 %1260
        %1264 = vrot.lane.b32.xlu0 %v1252, 96
        %v1265 = vpop.permute.xlu0 %1264
        %v1267 = vsel %vm412, %v756, %v1257
        %vm1268 = vcmask 523264
        %v1269 = vsel %vm1268, %v1267, %v1261
        %vm1270 = vcmask 785408
        %v1271 = vsel %vm1270, %v1269, %v1265
        %v1272 = vld [vmem:[%s4] sm:$0xff]
        %v1273 = vld [vmem:[%s4 + $0x8] sm:$0xff]
        %v1274 = vld [vmem:[%s4 + $0x10] sm:$0xff]
        %v1275 = vld [vmem:[%s4 + $0x18] sm:$0xff]
        %v1276 = vld [vmem:[%s4 + $0x20] sm:$0xff]
        %v1277 = vld [vmem:[%s4 + $0x28] sm:$0xff]
        %v1278 = vld [vmem:[%s4 + $0x30] sm:$0xff]
        %v1279 = vld [vmem:[%s4 + $0x38] sm:$0xff]
        %v1280 = vld [vmem:[%s4 + $0x40] sm:$0xff]
        %v1281 = vld [vmem:[%s4 + $0x48] sm:$0xff]
        %v1282 = vld [vmem:[%s4 + $0x50] sm:$0xff]
        %v1283 = vld [vmem:[%s4 + $0x58] sm:$0xff]
        %v1284 = vld [vmem:[%s4 + $0x60] sm:$0xff]
        %v1285 = vld [vmem:[%s4 + $0x68] sm:$0xff]
        %v1286 = vld [vmem:[%s4 + $0x70] sm:$0xff]
        %v1287 = vld [vmem:[%s4 + $0x78] sm:$0xff]
        %v1288 = vld [vmem:[%s5] sm:$0x1]
        %v1290 = vlaneseq
        %v1291 = vshrl.u32 %v1290, 7
        %v1292 = vsub.s32 0, %v1291
        %v1293 = vrot.slane %v1288, %v1292
        %1295 = vmatprep.subr.mxu0 0.0
        %1296 = vmatpush1.msra.mxu0 %v1272
        %1297 = vmatprep.subr.mxu0 0.0
        %1298 = vmatpush1.msra.mxu0 %v1273
        %1299 = vmatprep.subr.mxu0 0.0
        %1300 = vmatpush1.msra.mxu0 %v1274
        %1301 = vmatprep.subr.mxu0 0.0
        %1302 = vmatpush1.msra.mxu0 %v1275
        %1303 = vmatprep.subr.mxu0 0.0
        %1304 = vmatpush1.msra.mxu0 %v1276
        %1305 = vmatprep.subr.mxu0 0.0
        %1306 = vmatpush1.msra.mxu0 %v1277
        %1307 = vmatprep.subr.mxu0 0.0
        %1308 = vmatpush1.msra.mxu0 %v1278
        %1309 = vmatprep.subr.mxu0 0.0
        %1310 = vmatpush1.msra.mxu0 %v1279
        %1311 = vmatprep.subr.mxu0 0.0
        %1312 = vmatpush1.msra.mxu0 %v1280
        %1313 = vmatprep.subr.mxu0 0.0
        %1314 = vmatpush1.msra.mxu0 %v1281
        %1315 = vmatprep.subr.mxu0 0.0
        %1316 = vmatpush1.msra.mxu0 %v1282
        %1317 = vmatprep.subr.mxu0 0.0
        %1318 = vmatpush1.msra.mxu0 %v1283
        %1319 = vmatprep.subr.mxu0 0.0
        %1320 = vmatpush1.msra.mxu0 %v1284
        %1321 = vmatprep.subr.mxu0 0.0
        %1322 = vmatpush1.msra.mxu0 %v1285
        %1323 = vmatprep.subr.mxu0 0.0
        %1324 = vmatpush1.msra.mxu0 %v1286
        %1325 = vmatprep.subr.mxu0 0.0
        %1326 = vmatpush1.msra.mxu0 %v1287
        %1327 = vmatprep.subr.mxu0 0.0
        %1328 = vmatpush1.msra.mxu0 0.0
        %1329 = vmatprep.subr.mxu0 0.0
        %1330 = vmatpush1.msra.mxu0 0.0
        %1331 = vmatprep.subr.mxu0 0.0
        %1332 = vmatpush1.msra.mxu0 0.0
        %1333 = vmatprep.subr.mxu0 0.0
        %1334 = vmatpush1.msra.mxu0 0.0
        %1335 = vmatprep.subr.mxu0 0.0
        %1336 = vmatpush1.msra.mxu0 0.0
        %1337 = vmatprep.subr.mxu0 0.0
        %1338 = vmatpush1.msra.mxu0 0.0
        %1339 = vmatprep.subr.mxu0 0.0
        %1340 = vmatpush1.msra.mxu0 0.0
        %1341 = vmatprep.subr.mxu0 0.0
        %1342 = vmatpush1.msra.mxu0 0.0
        %1343 = vmatprep.subr.mxu0 0.0
        %1344 = vmatpush1.msra.mxu0 0.0
        %1345 = vmatprep.subr.mxu0 0.0
        %1346 = vmatpush1.msra.mxu0 0.0
        %1347 = vmatprep.subr.mxu0 0.0
        %1348 = vmatpush1.msra.mxu0 0.0
        %1349 = vmatprep.subr.mxu0 0.0
        %1350 = vmatpush1.msra.mxu0 0.0
        %1351 = vmatprep.subr.mxu0 0.0
        %1352 = vmatpush1.msra.mxu0 0.0
        %1353 = vmatprep.subr.mxu0 0.0
        %1354 = vmatpush1.msra.mxu0 0.0
        %1355 = vmatprep.subr.mxu0 0.0
        %1356 = vmatpush1.msra.mxu0 0.0
        %1357 = vmatprep.subr.mxu0 0.0
        %1358 = vmatpush1.msra.mxu0 0.0
        %1359 = vmatprep.mubr.f32.mxu0 0.0
        %1360 = vmatmul.mubr.f32.gmra.mrb[0].mxu0 %v1271
        %v1361 = vpop.f32.mrb[0].mxu0
        %v1362 = vadd.f32 %v1293, %v1361
        %v1363 = vpop.f32.mrb[0].mxu0
        %1364 = vdwg.mxu0
        %v1365 = vadd.f32 %v409, %v1362
        %v1366 = vld [vmem:[%s6] sm:$0x1]
        %v1367 = vld [vmem:[%s7] sm:$0x1]
        %v1368 = vsel %vm412, %v1365, 0.0
        %1369 = vadd.xlane.f32.xlu0 %v1368
        %v1370 = vpop.xlane.xlu0 %1369
        %v1371 = vmul.f32 %v1370, %v416
        %v1372 = vsub.f32 %v1365, %v1371
        %v1373 = vmul.f32 %v1372, %v1372
        %v1374 = vsel %vm412, %v1373, 0.0
        %1375 = vadd.xlane.f32.xlu0 %v1374
        %v1376 = vpop.xlane.xlu0 %1375
        %v1377 = vmul.f32 %v1376, %v416
        %v1378 = vadd.f32 %v1377, 1e-05
        %v1379 = vrsqrt.pop %v1378
        %v1380 = vmul.f32 %v1372, %v1379
        %v1382 = vlaneseq
        %v1383 = vshrl.u32 %v1382, 7
        %v1384 = vsub.s32 0, %v1383
        %v1385 = vrot.slane %v1366, %v1384
        %v1387 = vmul.f32 %v1380, %v1385
        %v1389 = vlaneseq
        %v1390 = vshrl.u32 %v1389, 7
        %v1391 = vsub.s32 0, %v1390
        %v1392 = vrot.slane %v1367, %v1391
        %v1394 = vadd.f32 %v1387, %v1392
        %v1395 = vld [vmem:[%s8] sm:$0xff]
        %v1396 = vld [vmem:[%s8 + $0x8] sm:$0xff]
        %v1397 = vld [vmem:[%s8 + $0x10] sm:$0xff]
        %v1398 = vld [vmem:[%s8 + $0x18] sm:$0xff]
        %v1399 = vld [vmem:[%s9] sm:$0x1]
        %v1401 = vlaneseq
        %v1402 = vshrl.u32 %v1401, 7
        %v1403 = vsub.s32 0, %v1402
        %v1404 = vrot.slane %v1399, %v1403
        %v1407 = vsel %vm412, %v1394, 0
        %1409 = vmatprep.subr.mxu0 0.0
        %1410 = vmatpush1.msra.mxu0 %v1395
        %1411 = vmatprep.subr.mxu0 0.0
        %1412 = vmatpush1.msra.mxu0 %v1396
        %1413 = vmatprep.subr.mxu0 0.0
        %1414 = vmatpush1.msra.mxu0 %v1397
        %1415 = vmatprep.subr.mxu0 0.0
        %1416 = vmatpush1.msra.mxu0 %v1398
        %1417 = vmatprep.subr.mxu0 0.0
        %1418 = vmatpush1.msra.mxu0 0.0
        %1419 = vmatprep.subr.mxu0 0.0
        %1420 = vmatpush1.msra.mxu0 0.0
        %1421 = vmatprep.subr.mxu0 0.0
        %1422 = vmatpush1.msra.mxu0 0.0
        %1423 = vmatprep.subr.mxu0 0.0
        %1424 = vmatpush1.msra.mxu0 0.0
        %1425 = vmatprep.subr.mxu0 0.0
        %1426 = vmatpush1.msra.mxu0 0.0
        %1427 = vmatprep.subr.mxu0 0.0
        %1428 = vmatpush1.msra.mxu0 0.0
        %1429 = vmatprep.subr.mxu0 0.0
        %1430 = vmatpush1.msra.mxu0 0.0
        %1431 = vmatprep.subr.mxu0 0.0
        %1432 = vmatpush1.msra.mxu0 0.0
        %1433 = vmatprep.subr.mxu0 0.0
        %1434 = vmatpush1.msra.mxu0 0.0
        %1435 = vmatprep.subr.mxu0 0.0
        %1436 = vmatpush1.msra.mxu0 0.0
        %1437 = vmatprep.subr.mxu0 0.0
        %1438 = vmatpush1.msra.mxu0 0.0
        %1439 = vmatprep.subr.mxu0 0.0
        %1440 = vmatpush1.msra.mxu0 0.0
        %1441 = vmatprep.subr.mxu0 0.0
        %1442 = vmatpush1.msra.mxu0 0.0
        %1443 = vmatprep.subr.mxu0 0.0
        %1444 = vmatpush1.msra.mxu0 0.0
        %1445 = vmatprep.subr.mxu0 0.0
        %1446 = vmatpush1.msra.mxu0 0.0
        %1447 = vmatprep.subr.mxu0 0.0
        %1448 = vmatpush1.msra.mxu0 0.0
        %1449 = vmatprep.subr.mxu0 0.0
        %1450 = vmatpush1.msra.mxu0 0.0
        %1451 = vmatprep.subr.mxu0 0.0
        %1452 = vmatpush1.msra.mxu0 0.0
        %1453 = vmatprep.subr.mxu0 0.0
        %1454 = vmatpush1.msra.mxu0 0.0
        %1455 = vmatprep.subr.mxu0 0.0
        %1456 = vmatpush1.msra.mxu0 0.0
        %1457 = vmatprep.subr.mxu0 0.0
        %1458 = vmatpush1.msra.mxu0 0.0
        %1459 = vmatprep.subr.mxu0 0.0
        %1460 = vmatpush1.msra.mxu0 0.0
        %1461 = vmatprep.subr.mxu0 0.0
        %1462 = vmatpush1.msra.mxu0 0.0
        %1463 = vmatprep.subr.mxu0 0.0
        %1464 = vmatpush1.msra.mxu0 0.0
        %1465 = vmatprep.subr.mxu0 0.0
        %1466 = vmatpush1.msra.mxu0 0.0
        %1467 = vmatprep.subr.mxu0 0.0
        %1468 = vmatpush1.msra.mxu0 0.0
        %1469 = vmatprep.subr.mxu0 0.0
        %1470 = vmatpush1.msra.mxu0 0.0
        %1471 = vmatprep.subr.mxu0 0.0
        %1472 = vmatpush1.msra.mxu0 0.0
        %1473 = vmatprep.mubr.f32.mxu0 0.0
        %1474 = vmatmul.mubr.f32.gmra.mrb[0].mxu0 %v1407
        %v1475 = vpop.f32.mrb[0].mxu0
        %v1476 = vadd.f32 %v1404, %v1475
        %v1477 = vpop.f32.mrb[0].mxu0
        %1478 = vdwg.mxu0
        %v1479 = vmax.f32 %v1476, 0.0
        %v1480 = vld [vmem:[%s10] sm:$0xff]
        %v1481 = vld [vmem:[%s10 + $0x8] sm:$0xff]
        %v1482 = vld [vmem:[%s10 + $0x10] sm:$0xff]
        %v1483 = vld [vmem:[%s10 + $0x18] sm:$0xff]
        %v1484 = vld [vmem:[%s10 + $0x20] sm:$0xff]
        %v1485 = vld [vmem:[%s10 + $0x28] sm:$0xff]
        %v1486 = vld [vmem:[%s10 + $0x30] sm:$0xff]
        %v1487 = vld [vmem:[%s10 + $0x38] sm:$0xff]
        %v1488 = vld [vmem:[%s10 + $0x40] sm:$0xff]
        %v1489 = vld [vmem:[%s10 + $0x48] sm:$0xff]
        %v1490 = vld [vmem:[%s10 + $0x50] sm:$0xff]
        %v1491 = vld [vmem:[%s10 + $0x58] sm:$0xff]
        %v1492 = vld [vmem:[%s10 + $0x60] sm:$0xff]
        %v1493 = vld [vmem:[%s10 + $0x68] sm:$0xff]
        %v1494 = vld [vmem:[%s10 + $0x70] sm:$0xff]
        %v1495 = vld [vmem:[%s10 + $0x78] sm:$0xff]
        %v1496 = vld [vmem:[%s11] sm:$0x1]
        %v1498 = vlaneseq
        %v1499 = vshrl.u32 %v1498, 7
        %v1500 = vsub.s32 0, %v1499
        %v1501 = vrot.slane %v1496, %v1500
        %1503 = vmatprep.subr.mxu0 0.0
        %1504 = vmatpush1.msra.mxu0 %v1480
        %1505 = vmatprep.subr.mxu0 0.0
        %1506 = vmatpush1.msra.mxu0 %v1481
        %1507 = vmatprep.subr.mxu0 0.0
        %1508 = vmatpush1.msra.mxu0 %v1482
        %1509 = vmatprep.subr.mxu0 0.0
        %1510 = vmatpush1.msra.mxu0 %v1483
        %1511 = vmatprep.subr.mxu0 0.0
        %1512 = vmatpush1.msra.mxu0 %v1484
        %1513 = vmatprep.subr.mxu0 0.0
        %1514 = vmatpush1.msra.mxu0 %v1485
        %1515 = vmatprep.subr.mxu0 0.0
        %1516 = vmatpush1.msra.mxu0 %v1486
        %1517 = vmatprep.subr.mxu0 0.0
        %1518 = vmatpush1.msra.mxu0 %v1487
        %1519 = vmatprep.subr.mxu0 0.0
        %1520 = vmatpush1.msra.mxu0 %v1488
        %1521 = vmatprep.subr.mxu0 0.0
        %1522 = vmatpush1.msra.mxu0 %v1489
        %1523 = vmatprep.subr.mxu0 0.0
        %1524 = vmatpush1.msra.mxu0 %v1490
        %1525 = vmatprep.subr.mxu0 0.0
        %1526 = vmatpush1.msra.mxu0 %v1491
        %1527 = vmatprep.subr.mxu0 0.0
        %1528 = vmatpush1.msra.mxu0 %v1492
        %1529 = vmatprep.subr.mxu0 0.0
        %1530 = vmatpush1.msra.mxu0 %v1493
        %1531 = vmatprep.subr.mxu0 0.0
        %1532 = vmatpush1.msra.mxu0 %v1494
        %1533 = vmatprep.subr.mxu0 0.0
        %1534 = vmatpush1.msra.mxu0 %v1495
        %1535 = vmatprep.subr.mxu0 0.0
        %1536 = vmatpush1.msra.mxu0 0.0
        %1537 = vmatprep.subr.mxu0 0.0
        %1538 = vmatpush1.msra.mxu0 0.0
        %1539 = vmatprep.subr.mxu0 0.0
        %1540 = vmatpush1.msra.mxu0 0.0
        %1541 = vmatprep.subr.mxu0 0.0
        %1542 = vmatpush1.msra.mxu0 0.0
        %1543 = vmatprep.subr.mxu0 0.0
        %1544 = vmatpush1.msra.mxu0 0.0
        %1545 = vmatprep.subr.mxu0 0.0
        %1546 = vmatpush1.msra.mxu0 0.0
        %1547 = vmatprep.subr.mxu0 0.0
        %1548 = vmatpush1.msra.mxu0 0.0
        %1549 = vmatprep.subr.mxu0 0.0
        %1550 = vmatpush1.msra.mxu0 0.0
        %1551 = vmatprep.subr.mxu0 0.0
        %1552 = vmatpush1.msra.mxu0 0.0
        %1553 = vmatprep.subr.mxu0 0.0
        %1554 = vmatpush1.msra.mxu0 0.0
        %1555 = vmatprep.subr.mxu0 0.0
        %1556 = vmatpush1.msra.mxu0 0.0
        %1557 = vmatprep.subr.mxu0 0.0
        %1558 = vmatpush1.msra.mxu0 0.0
        %1559 = vmatprep.subr.mxu0 0.0
        %1560 = vmatpush1.msra.mxu0 0.0
        %1561 = vmatprep.subr.mxu0 0.0
        %1562 = vmatpush1.msra.mxu0 0.0
        %1563 = vmatprep.subr.mxu0 0.0
        %1564 = vmatpush1.msra.mxu0 0.0
        %1565 = vmatprep.subr.mxu0 0.0
        %1566 = vmatpush1.msra.mxu0 0.0
        %1567 = vmatprep.mubr.f32.mxu0 0.0
        %1568 = vmatmul.mubr.f32.gmra.mrb[0].mxu0 %v1479
        %v1569 = vpop.f32.mrb[0].mxu0
        %v1570 = vadd.f32 %v1501, %v1569
        %v1571 = vpop.f32.mrb[0].mxu0
        %1572 = vdwg.mxu0
        %v1573 = vadd.f32 %v1365, %v1570
        %1574 = vst.msk [vmem:[%s404] sm:$0xff] %vm412, %v1573
        %s1575 = sand.u32 %s291, 1
        %s1576 = scalar_lea.sflag [#allocation3], %s1575
        %s1577 = sand.u32 %s291, 1
        %s1578 = smul.addr %s1577, 8
        %s1579 = scalar_lea.vmem [#allocation2], %s1578
        // Predicated region
        $region69: #{tpu_custom_call.1} parent=67 // pred_check
          %p1580 = pneg %p301
        $region70: #{tpu_custom_call.1} parent=67 // pred_check_branch
          %1582 = sbr.rel (%p1580) target = $region72
        $region71: #{tpu_custom_call.1} parent=67 // pred_region
          %s1584 = ssub.s32 128, 128
          %1585 = vsyncadd %s1576, %s1584
          %s1586 = smul.addr %s26, 128
          %s1587 = scalar_lea.hbm %s12, %s1586
          %s1589 = sshll.u32 %s1579, 4
          %s1590 = int_to_ptr.vmem [resolvable:$true] %s1589
          %1592 = dma.vmem_to_hbm [thread:$0]  %s1590, 128, %s1587, %s1576
        $region72: #{tpu_custom_call.1} parent=67 // pred_fallthru
          _
      $region68: #{tpu_custom_call.1} parent=5 // pred_fallthru
        _
      %p1593 = scmp.le.s32.totalorder 2, %s21
      // Predicated region
      $region73: #{tpu_custom_call.1} parent=5 // pred_check
        %p1594 = pneg %p1593
      $region74: #{tpu_custom_call.1} parent=5 // pred_check_branch
        %1596 = sbr.rel (%p1594) target = $region76
      $region75: #{tpu_custom_call.1} parent=5 // pred_region
        %s1597 = ssub.s32 %s21, 2
        // Predicated region
        $region77: #{tpu_custom_call.1} parent=75 // pred_check
          %p1598 = pneg %p307
        $region78: #{tpu_custom_call.1} parent=75 // pred_check_branch
          %1600 = sbr.rel (%p1598) target = $region80
        $region79: #{tpu_custom_call.1} parent=75 // pred_region
          %s1601 = sand.u32 %s292, 1
          %s1602 = scalar_lea.sflag [#allocation3], %s1601
          %s1603 = sand.u32 %s292, 1
          %s1604 = smul.addr %s1603, 8
          %s1605 = scalar_lea.vmem [#allocation2], %s1604
          %1606 = dma.done %s1602, 128
        $region80: #{tpu_custom_call.1} parent=75 // pred_fallthru
          _
      $region76: #{tpu_custom_call.1} parent=5 // pred_fallthru
        _
    $region6: #{tpu_custom_call.1} parent=1 // loop_footer
      %s25 = sadd.s32 1, %s21
    $region7: #{tpu_custom_call.1} parent=1 // loop_footer_branch
      %20 = sbr.rel target = $region3
    $region8: #{tpu_custom_call.1} parent=1 // loop_exit
      _
    %1607 = vsyncpa [#allocation3], 1
    %s1608 = scalar_lea.sflag [#allocation3], 1
    %1609 = vsyncpa %s1608, 1

</llo_original>
